<compile_context>
chip_gen: v7x
topology: tpu7x:2x2x1
jax: 0.10.0
libtpu: 0.0.40
codegen_flags: <defaults>
</compile_context>

<pallas_src>
import functools

import jax
import jax.numpy as jnp
from jax.experimental import pallas as pl
from jax.experimental.pallas import tpu as pltpu


def _linear_attention_kernel(x_ref, wqkv_ref, wfm1_ref, bfm1_ref,
                             wfm2_ref, bfm2_ref, wout_ref, o_ref,
                             *, num_heads, head_dim):
    """One grid step == TB batch rows, everything computed in f32 on-chip.

    x_ref    : (TB, S, H)   input hidden states
    wqkv_ref : (H, 3H)      fused Q/K/V projection weight (no bias)
    wfm1_ref : (H, 2H)      block-diagonal feature-map layer-1 weight
    bfm1_ref : (1, 2H)      tiled feature-map layer-1 bias
    wfm2_ref : (2H, H)      block-diagonal feature-map layer-2 weight
    bfm2_ref : (1, H)       tiled feature-map layer-2 bias
    wout_ref : (H, H)       output projection weight (no bias)
    o_ref    : (TB, S, H)   attention output
    """
    TB, S, H = x_ref.shape
    M = TB * S

    # ---- Fused QKV projection: a single (M, H) x (H, 3H) GEMM. ----
    x = x_ref[...].reshape(M, H)
    qkv = jnp.dot(x, wqkv_ref[...], preferred_element_type=jnp.float32)
    q = qkv[:, 0 * H:1 * H]
    k = qkv[:, 1 * H:2 * H]
    v = qkv[:, 2 * H:3 * H]

    # ---- Feature map on q and k: full-width block-diagonal GEMMs. ----
    b1 = bfm1_ref[...]          # hoisted bias loads (broadcast once each)
    b2 = bfm2_ref[...]

    def feature_map(t):
        h1 = jnp.dot(t, wfm1_ref[...], preferred_element_type=jnp.float32) + b1
        h1 = jnp.maximum(h1, 0.0)
        return jnp.dot(h1, wfm2_ref[...], preferred_element_type=jnp.float32) + b2

    qf = feature_map(q).reshape(TB, S, H)
    kf = feature_map(k).reshape(TB, S, H)
    v3 = v.reshape(TB, S, H)

    # ---- Linear attention per head, output projection folded into the loop. ----
    out_acc = jnp.zeros((M, H), jnp.float32)
    for h in range(num_heads):                       # static unroll over heads
        lo = h * head_dim
        hi = lo + head_dim
        qs = qf[:, :, lo:hi]                         # (TB, S, hd)
        ks = kf[:, :, lo:hi]
        vs = v3[:, :, lo:hi]

        # kv = k^T v per batch row -> (TB, hd, hd)
        kv = jnp.einsum('bsd,bse->bde', ks, vs,
                        preferred_element_type=jnp.float32)
        # numerator: q @ kv -> (TB, S, hd)
        numer = jnp.einsum('bsd,bde->bse', qs, kv,
                           preferred_element_type=jnp.float32)
        # denominator: q . sum_s(k) + 1e-8 (elementwise mul + lane reduce,
        # no explicit transpose). Kept as an exact divide: it is part of the
        # module's semantics and may be poorly conditioned, so no approx vrcp.
        ksum = jnp.sum(ks, axis=1, keepdims=True)                      # (TB, 1, hd)
        denom = jnp.sum(qs * ksum, axis=-1, keepdims=True) + 1e-8      # (TB, S, 1)
        head_out = (numer / denom).reshape(M, head_dim)

        # Fold the final output Linear: out += head_out @ Wout[lo:hi, :].
        out_acc = out_acc + jnp.dot(head_out, wout_ref[lo:hi, :],
                                    preferred_element_type=jnp.float32)

    o_ref[...] = out_acc.reshape(TB, S, H).astype(o_ref.dtype)


def linear_attention(hidden_states, params, *, num_heads, block_b=None):
    B, S, H = hidden_states.shape
    assert H % num_heads == 0
    head_dim = H // num_heads

    # ---- Trace-time weight preparation (outside the kernel) ----
    # Fuse Q/K/V projections into one (H, 3H) weight.
    wqkv = jnp.concatenate([params["wq"], params["wk"], params["wv"]], axis=1)
    # The feature map uses the same (hd, 2hd)/(2hd, hd) weights for every head;
    # build block-diagonal versions so it becomes two lane-dense GEMMs over all
    # heads at once.
    eye = jnp.eye(num_heads, dtype=params["w_fm1"].dtype)
    wfm1 = jnp.kron(eye, params["w_fm1"])                       # (H, 2H)
    bfm1 = jnp.tile(params["b_fm1"], num_heads)[None, :]        # (1, 2H)
    wfm2 = jnp.kron(eye, params["w_fm2"])                       # (2H, H)
    bfm2 = jnp.tile(params["b_fm2"], num_heads)[None, :]        # (1, H)
    wout = params["wout"]

    # Batch rows per grid step: target an MXU M-dimension of ~128 rows, capped
    # by B. (For large B on v7x keep >= 2 grid steps so both TensorCores work.)
    if block_b is None:
        block_b = max(1, min(B, pl.cdiv(128, S)))
        while B % block_b:
            block_b -= 1
    TB = block_b
    grid = (B // TB,)

    kernel = functools.partial(_linear_attention_kernel,
                               num_heads=num_heads, head_dim=head_dim)

    def const(shape):
        return pl.BlockSpec(shape, lambda i: (0,) * len(shape))

    return pl.pallas_call(
        kernel,
        out_shape=jax.ShapeDtypeStruct((B, S, H), hidden_states.dtype),
        grid_spec=pltpu.PrefetchScalarGridSpec(
            num_scalar_prefetch=0,
            grid=grid,
            in_specs=[
                pl.BlockSpec((TB, S, H), lambda i: (i, 0, 0)),   # hidden_states
                const((H, 3 * H)),                                # fused QKV weight
                const((H, 2 * H)),                                # feature-map W1 (block diag)
                const((1, 2 * H)),                                # feature-map b1 (tiled)
                const((2 * H, H)),                                # feature-map W2 (block diag)
                const((1, H)),                                    # feature-map b2 (tiled)
                const((H, H)),                                    # output weight
            ],
            out_specs=pl.BlockSpec((TB, S, H), lambda i: (i, 0, 0)),
        ),
        compiler_params=pltpu.CompilerParams(
            dimension_semantics=("parallel",),
            vmem_limit_bytes=32 * 1024 * 1024,
        ),
    )(hidden_states, wqkv, wfm1, bfm1, wfm2, bfm2, wout)


def _reference(hidden_states, params, *, num_heads):
    """Pure-JAX reference mirroring the PyTorch LinearAttention forward."""
    B, S, H = hidden_states.shape
    hd = H // num_heads

    q = hidden_states @ params["wq"]
    k = hidden_states @ params["wk"]
    v = hidden_states @ params["wv"]

    def split(t):
        return t.reshape(B, S, num_heads, hd).transpose(0, 2, 1, 3)

    qh, kh, vh = split(q), split(k), split(v)

    def fmap(t):
        h1 = jnp.maximum(t @ params["w_fm1"] + params["b_fm1"], 0.0)
        return h1 @ params["w_fm2"] + params["b_fm2"]

    qh = fmap(qh)
    kh = fmap(kh)

    kv = jnp.einsum("bhsd,bhse->bhde", kh, vh)                 # (B, nh, hd, hd)
    ksum = jnp.sum(kh, axis=-2, keepdims=True)                 # (B, nh, 1, hd)
    numer = jnp.einsum("bhsd,bhde->bhse", qh, kv)              # (B, nh, S, hd)
    denom = jnp.matmul(qh, jnp.swapaxes(ksum, -1, -2)) + 1e-8  # (B, nh, S, 1)
    attn = numer / denom
    attn = attn.transpose(0, 2, 1, 3).reshape(B, S, H)
    return attn @ params["wout"]


def init_params(key, hidden_size, num_heads):
    H = hidden_size
    hd = H // num_heads
    ks = jax.random.split(key, 8)
    n = lambda k, shape: (0.02 * jax.random.normal(k, shape)).astype(jnp.float32)
    # All Linear weights stored as (in_features, out_features): y = x @ W (+ b).
    return {
        "wq": n(ks[0], (H, H)),
        "wk": n(ks[1], (H, H)),
        "wv": n(ks[2], (H, H)),
        "wout": n(ks[3], (H, H)),
        "w_fm1": n(ks[4], (hd, 2 * hd)),
        "b_fm1": n(ks[5], (2 * hd,)),
        "w_fm2": n(ks[6], (2 * hd, hd)),
        "b_fm2": n(ks[7], (hd,)),
    }


if __name__ == "__main__":
    # Small config consistent with the module: batch=2, seq=8, hidden=32,
    # num_attention_heads=4 (head_dim=8).
    B, S, H, NUM_HEADS = 2, 8, 32, 4

    key = jax.random.PRNGKey(0)
    k_x, k_p = jax.random.split(key)
    hidden_states = jax.random.normal(k_x, (B, S, H), dtype=jnp.float32)
    params = init_params(k_p, H, NUM_HEADS)

    out = linear_attention(hidden_states, params, num_heads=NUM_HEADS)
    out = jax.block_until_ready(out)

    ref = _reference(hidden_states, params, num_heads=NUM_HEADS)
    assert out.shape == (B, S, H)
    # f32 MXU matmuls are decomposed into bf16 passes with different groupings
    # (fused QKV, block-diag feature map, folded output proj), so allow a small
    # numerical tolerance; real bugs would show up as O(0.1) errors.
    assert jnp.allclose(out, ref, atol=2e-3, rtol=2e-3), "mismatch vs reference"

    print("KERNEL_OK")
</pallas_src>

<mosaic_0001>
module attributes {stable_mosaic.version = 11 : i64} {
  func.func @_linear_attention_kernel(%arg0: i32, %arg1: memref<2x8x32xf32, #tpu.memory_space<vmem>>, %arg2: memref<32x96xf32, #tpu.memory_space<vmem>>, %arg3: memref<32x64xf32, #tpu.memory_space<vmem>>, %arg4: memref<1x64xf32, #tpu.memory_space<vmem>>, %arg5: memref<64x32xf32, #tpu.memory_space<vmem>>, %arg6: memref<1x32xf32, #tpu.memory_space<vmem>>, %arg7: memref<32x32xf32, #tpu.memory_space<vmem>>, %arg8: memref<2x8x32xf32, #tpu.memory_space<vmem>>) attributes {dimension_semantics = [#tpu.dimension_semantics<parallel>], iteration_bounds = array<i64: 1>, scalar_prefetch = 0 : i64, scratch_operands = 0 : i64, tpu.core_type = #tpu.core_type<tc>, window_params = [{transform_indices = @transform_0, window_bounds = array<i64: 2, 8, 32>}, {pipeline_mode = #tpu.pipeline_mode<synchronous>, transform_indices = @transform_1, window_bounds = array<i64: 32, 96>}, {pipeline_mode = #tpu.pipeline_mode<synchronous>, transform_indices = @transform_2, window_bounds = array<i64: 32, 64>}, {pipeline_mode = #tpu.pipeline_mode<synchronous>, transform_indices = @transform_3, window_bounds = array<i64: 1, 64>}, {pipeline_mode = #tpu.pipeline_mode<synchronous>, transform_indices = @transform_4, window_bounds = array<i64: 64, 32>}, {pipeline_mode = #tpu.pipeline_mode<synchronous>, transform_indices = @transform_5, window_bounds = array<i64: 1, 32>}, {pipeline_mode = #tpu.pipeline_mode<synchronous>, transform_indices = @transform_6, window_bounds = array<i64: 32, 32>}, {transform_indices = @transform_7, window_bounds = array<i64: 2, 8, 32>}]} {
    %c0 = arith.constant 0 : index
    %c0_0 = arith.constant 0 : index
    %c0_1 = arith.constant 0 : index
    %0 = vector.load %arg1[%c0, %c0_0, %c0_1] : memref<2x8x32xf32, #tpu.memory_space<vmem>>, vector<2x8x32xf32>
    %1 = vector.shape_cast %0 : vector<2x8x32xf32> to vector<16x32xf32>
    %c0_2 = arith.constant 0 : index
    %c0_3 = arith.constant 0 : index
    %2 = vector.load %arg2[%c0_2, %c0_3] : memref<32x96xf32, #tpu.memory_space<vmem>>, vector<32x96xf32>
    %cst = arith.constant dense<0.000000e+00> : vector<16x96xf32>
    %3 = tpu.matmul %1, %2, %cst {dimension_numbers = #tpu.dot_dimension_numbers<[1], [0], [0], [1], [0, 0, 1, 1], [], []>} : vector<16x32xf32>, vector<32x96xf32>, vector<16x96xf32> -> vector<16x96xf32>
    %4 = vector.extract_strided_slice %3 {offsets = [0, 0], sizes = [16, 32], strides = [1, 1]} : vector<16x96xf32> to vector<16x32xf32>
    %5 = vector.extract_strided_slice %3 {offsets = [0, 32], sizes = [16, 32], strides = [1, 1]} : vector<16x96xf32> to vector<16x32xf32>
    %6 = vector.extract_strided_slice %3 {offsets = [0, 64], sizes = [16, 32], strides = [1, 1]} : vector<16x96xf32> to vector<16x32xf32>
    %c0_4 = arith.constant 0 : index
    %c0_5 = arith.constant 0 : index
    %7 = vector.load %arg4[%c0_4, %c0_5] : memref<1x64xf32, #tpu.memory_space<vmem>>, vector<1x64xf32>
    %c0_6 = arith.constant 0 : index
    %c0_7 = arith.constant 0 : index
    %8 = vector.load %arg6[%c0_6, %c0_7] : memref<1x32xf32, #tpu.memory_space<vmem>>, vector<1x32xf32>
    %c0_8 = arith.constant 0 : index
    %c0_9 = arith.constant 0 : index
    %9 = vector.load %arg3[%c0_8, %c0_9] : memref<32x64xf32, #tpu.memory_space<vmem>>, vector<32x64xf32>
    %cst_10 = arith.constant dense<0.000000e+00> : vector<16x64xf32>
    %10 = tpu.matmul %4, %9, %cst_10 {dimension_numbers = #tpu.dot_dimension_numbers<[1], [0], [0], [1], [0, 0, 1, 1], [], []>} : vector<16x32xf32>, vector<32x64xf32>, vector<16x64xf32> -> vector<16x64xf32>
    %11 = vector.broadcast %7 : vector<1x64xf32> to vector<16x64xf32>
    %12 = arith.addf %10, %11 : vector<16x64xf32>
    %cst_11 = arith.constant 0.000000e+00 : f32
    %13 = vector.broadcast %cst_11 : f32 to vector<16x64xf32>
    %14 = arith.maximumf %12, %13 : vector<16x64xf32>
    %c0_12 = arith.constant 0 : index
    %c0_13 = arith.constant 0 : index
    %15 = vector.load %arg5[%c0_12, %c0_13] : memref<64x32xf32, #tpu.memory_space<vmem>>, vector<64x32xf32>
    %cst_14 = arith.constant dense<0.000000e+00> : vector<16x32xf32>
    %16 = tpu.matmul %14, %15, %cst_14 {dimension_numbers = #tpu.dot_dimension_numbers<[1], [0], [0], [1], [0, 0, 1, 1], [], []>} : vector<16x64xf32>, vector<64x32xf32>, vector<16x32xf32> -> vector<16x32xf32>
    %17 = vector.broadcast %8 : vector<1x32xf32> to vector<16x32xf32>
    %18 = arith.addf %16, %17 : vector<16x32xf32>
    %19 = vector.shape_cast %18 : vector<16x32xf32> to vector<2x8x32xf32>
    %c0_15 = arith.constant 0 : index
    %c0_16 = arith.constant 0 : index
    %20 = vector.load %arg3[%c0_15, %c0_16] : memref<32x64xf32, #tpu.memory_space<vmem>>, vector<32x64xf32>
    %cst_17 = arith.constant dense<0.000000e+00> : vector<16x64xf32>
    %21 = tpu.matmul %5, %20, %cst_17 {dimension_numbers = #tpu.dot_dimension_numbers<[1], [0], [0], [1], [0, 0, 1, 1], [], []>} : vector<16x32xf32>, vector<32x64xf32>, vector<16x64xf32> -> vector<16x64xf32>
    %22 = vector.broadcast %7 : vector<1x64xf32> to vector<16x64xf32>
    %23 = arith.addf %21, %22 : vector<16x64xf32>
    %cst_18 = arith.constant 0.000000e+00 : f32
    %24 = vector.broadcast %cst_18 : f32 to vector<16x64xf32>
    %25 = arith.maximumf %23, %24 : vector<16x64xf32>
    %c0_19 = arith.constant 0 : index
    %c0_20 = arith.constant 0 : index
    %26 = vector.load %arg5[%c0_19, %c0_20] : memref<64x32xf32, #tpu.memory_space<vmem>>, vector<64x32xf32>
    %cst_21 = arith.constant dense<0.000000e+00> : vector<16x32xf32>
    %27 = tpu.matmul %25, %26, %cst_21 {dimension_numbers = #tpu.dot_dimension_numbers<[1], [0], [0], [1], [0, 0, 1, 1], [], []>} : vector<16x64xf32>, vector<64x32xf32>, vector<16x32xf32> -> vector<16x32xf32>
    %28 = vector.broadcast %8 : vector<1x32xf32> to vector<16x32xf32>
    %29 = arith.addf %27, %28 : vector<16x32xf32>
    %30 = vector.shape_cast %29 : vector<16x32xf32> to vector<2x8x32xf32>
    %31 = vector.shape_cast %6 : vector<16x32xf32> to vector<2x8x32xf32>
    %cst_22 = arith.constant 0.000000e+00 : f32
    %32 = vector.broadcast %cst_22 : f32 to vector<16x32xf32>
    %33 = vector.extract_strided_slice %19 {offsets = [0, 0, 0], sizes = [2, 8, 8], strides = [1, 1, 1]} : vector<2x8x32xf32> to vector<2x8x8xf32>
    %34 = vector.extract_strided_slice %30 {offsets = [0, 0, 0], sizes = [2, 8, 8], strides = [1, 1, 1]} : vector<2x8x32xf32> to vector<2x8x8xf32>
    %35 = vector.extract_strided_slice %31 {offsets = [0, 0, 0], sizes = [2, 8, 8], strides = [1, 1, 1]} : vector<2x8x32xf32> to vector<2x8x8xf32>
    "tpu.trace_start"() <{level = 10 : i32, message = "bsd,bse->bde"}> : () -> ()
    %cst_23 = arith.constant dense<0.000000e+00> : vector<2x8x8xf32>
    %36 = tpu.matmul %34, %35, %cst_23 {dimension_numbers = #tpu.dot_dimension_numbers<[1], [1], [2], [2], [0, 0, 0, 2, 1, 2], [0], [0]>} : vector<2x8x8xf32>, vector<2x8x8xf32>, vector<2x8x8xf32> -> vector<2x8x8xf32>
    "tpu.trace_stop"() : () -> ()
    "tpu.trace_start"() <{level = 10 : i32, message = "bsd,bde->bse"}> : () -> ()
    %cst_24 = arith.constant dense<0.000000e+00> : vector<2x8x8xf32>
    %37 = tpu.matmul %33, %36, %cst_24 {dimension_numbers = #tpu.dot_dimension_numbers<[2], [1], [1], [2], [0, 0, 0, 1, 1, 2], [0], [0]>} : vector<2x8x8xf32>, vector<2x8x8xf32>, vector<2x8x8xf32> -> vector<2x8x8xf32>
    "tpu.trace_stop"() : () -> ()
    %cst_25 = arith.constant dense<0.000000e+00> : vector<2x8xf32>
    %38 = vector.multi_reduction <add>, %34, %cst_25 [1] : vector<2x8x8xf32> to vector<2x8xf32>
    %39 = vector.shape_cast %38 : vector<2x8xf32> to vector<2x1x8xf32>
    %40 = vector.broadcast %39 : vector<2x1x8xf32> to vector<2x8x8xf32>
    %41 = arith.mulf %33, %40 : vector<2x8x8xf32>
    %cst_26 = arith.constant dense<0.000000e+00> : vector<2x8xf32>
    %42 = vector.multi_reduction <add>, %41, %cst_26 [2] : vector<2x8x8xf32> to vector<2x8xf32>
    %43 = vector.shape_cast %42 : vector<2x8xf32> to vector<2x8x1xf32>
    %cst_27 = arith.constant 9.99999993E-9 : f32
    %44 = vector.broadcast %cst_27 : f32 to vector<2x8x1xf32>
    %45 = arith.addf %43, %44 : vector<2x8x1xf32>
    %46 = vector.broadcast %45 : vector<2x8x1xf32> to vector<2x8x8xf32>
    %47 = arith.divf %37, %46 : vector<2x8x8xf32>
    %48 = vector.shape_cast %47 : vector<2x8x8xf32> to vector<16x8xf32>
    %c0_28 = arith.constant 0 : index
    %c0_29 = arith.constant 0 : index
    %49 = vector.load %arg7[%c0_28, %c0_29] : memref<32x32xf32, #tpu.memory_space<vmem>>, vector<8x32xf32>
    %cst_30 = arith.constant dense<0.000000e+00> : vector<16x32xf32>
    %50 = tpu.matmul %48, %49, %cst_30 {dimension_numbers = #tpu.dot_dimension_numbers<[1], [0], [0], [1], [0, 0, 1, 1], [], []>} : vector<16x8xf32>, vector<8x32xf32>, vector<16x32xf32> -> vector<16x32xf32>
    %51 = arith.addf %32, %50 : vector<16x32xf32>
    %52 = vector.extract_strided_slice %19 {offsets = [0, 0, 8], sizes = [2, 8, 8], strides = [1, 1, 1]} : vector<2x8x32xf32> to vector<2x8x8xf32>
    %53 = vector.extract_strided_slice %30 {offsets = [0, 0, 8], sizes = [2, 8, 8], strides = [1, 1, 1]} : vector<2x8x32xf32> to vector<2x8x8xf32>
    %54 = vector.extract_strided_slice %31 {offsets = [0, 0, 8], sizes = [2, 8, 8], strides = [1, 1, 1]} : vector<2x8x32xf32> to vector<2x8x8xf32>
    "tpu.trace_start"() <{level = 10 : i32, message = "bsd,bse->bde"}> : () -> ()
    %cst_31 = arith.constant dense<0.000000e+00> : vector<2x8x8xf32>
    %55 = tpu.matmul %53, %54, %cst_31 {dimension_numbers = #tpu.dot_dimension_numbers<[1], [1], [2], [2], [0, 0, 0, 2, 1, 2], [0], [0]>} : vector<2x8x8xf32>, vector<2x8x8xf32>, vector<2x8x8xf32> -> vector<2x8x8xf32>
    "tpu.trace_stop"() : () -> ()
    "tpu.trace_start"() <{level = 10 : i32, message = "bsd,bde->bse"}> : () -> ()
    %cst_32 = arith.constant dense<0.000000e+00> : vector<2x8x8xf32>
    %56 = tpu.matmul %52, %55, %cst_32 {dimension_numbers = #tpu.dot_dimension_numbers<[2], [1], [1], [2], [0, 0, 0, 1, 1, 2], [0], [0]>} : vector<2x8x8xf32>, vector<2x8x8xf32>, vector<2x8x8xf32> -> vector<2x8x8xf32>
    "tpu.trace_stop"() : () -> ()
    %cst_33 = arith.constant dense<0.000000e+00> : vector<2x8xf32>
    %57 = vector.multi_reduction <add>, %53, %cst_33 [1] : vector<2x8x8xf32> to vector<2x8xf32>
    %58 = vector.shape_cast %57 : vector<2x8xf32> to vector<2x1x8xf32>
    %59 = vector.broadcast %58 : vector<2x1x8xf32> to vector<2x8x8xf32>
    %60 = arith.mulf %52, %59 : vector<2x8x8xf32>
    %cst_34 = arith.constant dense<0.000000e+00> : vector<2x8xf32>
    %61 = vector.multi_reduction <add>, %60, %cst_34 [2] : vector<2x8x8xf32> to vector<2x8xf32>
    %62 = vector.shape_cast %61 : vector<2x8xf32> to vector<2x8x1xf32>
    %cst_35 = arith.constant 9.99999993E-9 : f32
    %63 = vector.broadcast %cst_35 : f32 to vector<2x8x1xf32>
    %64 = arith.addf %62, %63 : vector<2x8x1xf32>
    %65 = vector.broadcast %64 : vector<2x8x1xf32> to vector<2x8x8xf32>
    %66 = arith.divf %56, %65 : vector<2x8x8xf32>
    %67 = vector.shape_cast %66 : vector<2x8x8xf32> to vector<16x8xf32>
    %c8 = arith.constant 8 : index
    %c0_36 = arith.constant 0 : index
    %68 = vector.load %arg7[%c8, %c0_36] : memref<32x32xf32, #tpu.memory_space<vmem>>, vector<8x32xf32>
    %cst_37 = arith.constant dense<0.000000e+00> : vector<16x32xf32>
    %69 = tpu.matmul %67, %68, %cst_37 {dimension_numbers = #tpu.dot_dimension_numbers<[1], [0], [0], [1], [0, 0, 1, 1], [], []>} : vector<16x8xf32>, vector<8x32xf32>, vector<16x32xf32> -> vector<16x32xf32>
    %70 = arith.addf %51, %69 : vector<16x32xf32>
    %71 = vector.extract_strided_slice %19 {offsets = [0, 0, 16], sizes = [2, 8, 8], strides = [1, 1, 1]} : vector<2x8x32xf32> to vector<2x8x8xf32>
    %72 = vector.extract_strided_slice %30 {offsets = [0, 0, 16], sizes = [2, 8, 8], strides = [1, 1, 1]} : vector<2x8x32xf32> to vector<2x8x8xf32>
    %73 = vector.extract_strided_slice %31 {offsets = [0, 0, 16], sizes = [2, 8, 8], strides = [1, 1, 1]} : vector<2x8x32xf32> to vector<2x8x8xf32>
    "tpu.trace_start"() <{level = 10 : i32, message = "bsd,bse->bde"}> : () -> ()
    %cst_38 = arith.constant dense<0.000000e+00> : vector<2x8x8xf32>
    %74 = tpu.matmul %72, %73, %cst_38 {dimension_numbers = #tpu.dot_dimension_numbers<[1], [1], [2], [2], [0, 0, 0, 2, 1, 2], [0], [0]>} : vector<2x8x8xf32>, vector<2x8x8xf32>, vector<2x8x8xf32> -> vector<2x8x8xf32>
    "tpu.trace_stop"() : () -> ()
    "tpu.trace_start"() <{level = 10 : i32, message = "bsd,bde->bse"}> : () -> ()
    %cst_39 = arith.constant dense<0.000000e+00> : vector<2x8x8xf32>
    %75 = tpu.matmul %71, %74, %cst_39 {dimension_numbers = #tpu.dot_dimension_numbers<[2], [1], [1], [2], [0, 0, 0, 1, 1, 2], [0], [0]>} : vector<2x8x8xf32>, vector<2x8x8xf32>, vector<2x8x8xf32> -> vector<2x8x8xf32>
    "tpu.trace_stop"() : () -> ()
    %cst_40 = arith.constant dense<0.000000e+00> : vector<2x8xf32>
    %76 = vector.multi_reduction <add>, %72, %cst_40 [1] : vector<2x8x8xf32> to vector<2x8xf32>
    %77 = vector.shape_cast %76 : vector<2x8xf32> to vector<2x1x8xf32>
    %78 = vector.broadcast %77 : vector<2x1x8xf32> to vector<2x8x8xf32>
    %79 = arith.mulf %71, %78 : vector<2x8x8xf32>
    %cst_41 = arith.constant dense<0.000000e+00> : vector<2x8xf32>
    %80 = vector.multi_reduction <add>, %79, %cst_41 [2] : vector<2x8x8xf32> to vector<2x8xf32>
    %81 = vector.shape_cast %80 : vector<2x8xf32> to vector<2x8x1xf32>
    %cst_42 = arith.constant 9.99999993E-9 : f32
    %82 = vector.broadcast %cst_42 : f32 to vector<2x8x1xf32>
    %83 = arith.addf %81, %82 : vector<2x8x1xf32>
    %84 = vector.broadcast %83 : vector<2x8x1xf32> to vector<2x8x8xf32>
    %85 = arith.divf %75, %84 : vector<2x8x8xf32>
    %86 = vector.shape_cast %85 : vector<2x8x8xf32> to vector<16x8xf32>
    %c16 = arith.constant 16 : index
    %c0_43 = arith.constant 0 : index
    %87 = vector.load %arg7[%c16, %c0_43] : memref<32x32xf32, #tpu.memory_space<vmem>>, vector<8x32xf32>
    %cst_44 = arith.constant dense<0.000000e+00> : vector<16x32xf32>
    %88 = tpu.matmul %86, %87, %cst_44 {dimension_numbers = #tpu.dot_dimension_numbers<[1], [0], [0], [1], [0, 0, 1, 1], [], []>} : vector<16x8xf32>, vector<8x32xf32>, vector<16x32xf32> -> vector<16x32xf32>
    %89 = arith.addf %70, %88 : vector<16x32xf32>
    %90 = vector.extract_strided_slice %19 {offsets = [0, 0, 24], sizes = [2, 8, 8], strides = [1, 1, 1]} : vector<2x8x32xf32> to vector<2x8x8xf32>
    %91 = vector.extract_strided_slice %30 {offsets = [0, 0, 24], sizes = [2, 8, 8], strides = [1, 1, 1]} : vector<2x8x32xf32> to vector<2x8x8xf32>
    %92 = vector.extract_strided_slice %31 {offsets = [0, 0, 24], sizes = [2, 8, 8], strides = [1, 1, 1]} : vector<2x8x32xf32> to vector<2x8x8xf32>
    "tpu.trace_start"() <{level = 10 : i32, message = "bsd,bse->bde"}> : () -> ()
    %cst_45 = arith.constant dense<0.000000e+00> : vector<2x8x8xf32>
    %93 = tpu.matmul %91, %92, %cst_45 {dimension_numbers = #tpu.dot_dimension_numbers<[1], [1], [2], [2], [0, 0, 0, 2, 1, 2], [0], [0]>} : vector<2x8x8xf32>, vector<2x8x8xf32>, vector<2x8x8xf32> -> vector<2x8x8xf32>
    "tpu.trace_stop"() : () -> ()
    "tpu.trace_start"() <{level = 10 : i32, message = "bsd,bde->bse"}> : () -> ()
    %cst_46 = arith.constant dense<0.000000e+00> : vector<2x8x8xf32>
    %94 = tpu.matmul %90, %93, %cst_46 {dimension_numbers = #tpu.dot_dimension_numbers<[2], [1], [1], [2], [0, 0, 0, 1, 1, 2], [0], [0]>} : vector<2x8x8xf32>, vector<2x8x8xf32>, vector<2x8x8xf32> -> vector<2x8x8xf32>
    "tpu.trace_stop"() : () -> ()
    %cst_47 = arith.constant dense<0.000000e+00> : vector<2x8xf32>
    %95 = vector.multi_reduction <add>, %91, %cst_47 [1] : vector<2x8x8xf32> to vector<2x8xf32>
    %96 = vector.shape_cast %95 : vector<2x8xf32> to vector<2x1x8xf32>
    %97 = vector.broadcast %96 : vector<2x1x8xf32> to vector<2x8x8xf32>
    %98 = arith.mulf %90, %97 : vector<2x8x8xf32>
    %cst_48 = arith.constant dense<0.000000e+00> : vector<2x8xf32>
    %99 = vector.multi_reduction <add>, %98, %cst_48 [2] : vector<2x8x8xf32> to vector<2x8xf32>
    %100 = vector.shape_cast %99 : vector<2x8xf32> to vector<2x8x1xf32>
    %cst_49 = arith.constant 9.99999993E-9 : f32
    %101 = vector.broadcast %cst_49 : f32 to vector<2x8x1xf32>
    %102 = arith.addf %100, %101 : vector<2x8x1xf32>
    %103 = vector.broadcast %102 : vector<2x8x1xf32> to vector<2x8x8xf32>
    %104 = arith.divf %94, %103 : vector<2x8x8xf32>
    %105 = vector.shape_cast %104 : vector<2x8x8xf32> to vector<16x8xf32>
    %c24 = arith.constant 24 : index
    %c0_50 = arith.constant 0 : index
    %106 = vector.load %arg7[%c24, %c0_50] : memref<32x32xf32, #tpu.memory_space<vmem>>, vector<8x32xf32>
    %cst_51 = arith.constant dense<0.000000e+00> : vector<16x32xf32>
    %107 = tpu.matmul %105, %106, %cst_51 {dimension_numbers = #tpu.dot_dimension_numbers<[1], [0], [0], [1], [0, 0, 1, 1], [], []>} : vector<16x8xf32>, vector<8x32xf32>, vector<16x32xf32> -> vector<16x32xf32>
    %108 = arith.addf %89, %107 : vector<16x32xf32>
    %109 = vector.shape_cast %108 : vector<16x32xf32> to vector<2x8x32xf32>
    %c0_52 = arith.constant 0 : index
    %c0_53 = arith.constant 0 : index
    %c0_54 = arith.constant 0 : index
    %110 = vector.load %arg8[%c0_52, %c0_53, %c0_54] : memref<2x8x32xf32, #tpu.memory_space<vmem>>, vector<2x8x32xf32>
    tpu.vector_store %arg8[%c0_52, %c0_53, %c0_54], %109 {strides = array<i32>} : memref<2x8x32xf32, #tpu.memory_space<vmem>>, vector<2x8x32xf32>,
    return
  }
  func.func @transform_0(%arg0: i32) -> (i32, i32, i32) {
    %c0_i32 = arith.constant 0 : i32
    %c0_i32_0 = arith.constant 0 : i32
    %c0_i32_1 = arith.constant 0 : i32
    return %arg0, %c0_i32, %c0_i32_0 : i32, i32, i32
  }
  func.func @transform_1(%arg0: i32) -> (i32, i32) {
    %c0_i32 = arith.constant 0 : i32
    %c0_i32_0 = arith.constant 0 : i32
    %c0_i32_1 = arith.constant 0 : i32
    return %c0_i32, %c0_i32_0 : i32, i32
  }
  func.func @transform_2(%arg0: i32) -> (i32, i32) {
    %c0_i32 = arith.constant 0 : i32
    %c0_i32_0 = arith.constant 0 : i32
    %c0_i32_1 = arith.constant 0 : i32
    return %c0_i32, %c0_i32_0 : i32, i32
  }
  func.func @transform_3(%arg0: i32) -> (i32, i32) {
    %c0_i32 = arith.constant 0 : i32
    %c0_i32_0 = arith.constant 0 : i32
    %c0_i32_1 = arith.constant 0 : i32
    return %c0_i32, %c0_i32_0 : i32, i32
  }
  func.func @transform_4(%arg0: i32) -> (i32, i32) {
    %c0_i32 = arith.constant 0 : i32
    %c0_i32_0 = arith.constant 0 : i32
    %c0_i32_1 = arith.constant 0 : i32
    return %c0_i32, %c0_i32_0 : i32, i32
  }
  func.func @transform_5(%arg0: i32) -> (i32, i32) {
    %c0_i32 = arith.constant 0 : i32
    %c0_i32_0 = arith.constant 0 : i32
    %c0_i32_1 = arith.constant 0 : i32
    return %c0_i32, %c0_i32_0 : i32, i32
  }
  func.func @transform_6(%arg0: i32) -> (i32, i32) {
    %c0_i32 = arith.constant 0 : i32
    %c0_i32_0 = arith.constant 0 : i32
    %c0_i32_1 = arith.constant 0 : i32
    return %c0_i32, %c0_i32_0 : i32, i32
  }
  func.func @transform_7(%arg0: i32) -> (i32, i32, i32) {
    %c0_i32 = arith.constant 0 : i32
    %c0_i32_0 = arith.constant 0 : i32
    %c0_i32_1 = arith.constant 0 : i32
    return %arg0, %c0_i32, %c0_i32_0 : i32, i32, i32
  }
}

</mosaic_0001>

<llo_original>
// kernel: tpu_custom_call.1
$region0: #{tpu_custom_call.1}
  #allocation0 [shape = 'u32[]', space=smem, size = 0x4, offset = 0x4, fixed_abs, tag = 'smem constant byte address 0x4 - core index']
  #allocation1 [shape = 'u32[144,128]{1,0:T(1,128)}', space=vmem, size = 0x12000, scoped, tag = 'internal scratch']
  %s0 = inlined_call_operand.hbm [shape: f32[2,8,32], index: 0, kind: input, shape index: {}]
  %s1 = inlined_call_operand.vmem [shape: f32[32,96], index: 1, kind: input, shape index: {}]
  %s2 = inlined_call_operand.vmem [shape: f32[32,64], index: 2, kind: input, shape index: {}]
  %s3 = inlined_call_operand.vmem [shape: f32[1,64], index: 3, kind: input, shape index: {}]
  %s4 = inlined_call_operand.vmem [shape: f32[64,32], index: 4, kind: input, shape index: {}]
  %s5 = inlined_call_operand.vmem [shape: f32[1,32], index: 5, kind: input, shape index: {}]
  %s6 = inlined_call_operand.vmem [shape: f32[32,32], index: 6, kind: input, shape index: {}]
  %s7 = inlined_call_operand.hbm [shape: f32[2,8,32], index: 7, kind: output, shape index: {}]
  %s8 = sld [smem:[#allocation0]]
  $region42: #{tpu_custom_call.1} parent=0
    _
  %s10 = ssub.s32 1, %s8
  %s11 = scalar_select 0, %s10, %s8
  $region1: #{tpu_custom_call.1} parent=0
    #allocation2 [shape = 'u8[8192]{0}', space=vmem, size = 0x2000, scoped, tag = 'input window, operand 0, single buffered']
    #allocation3 [shape = 's32[1]{0}', space=sflag, size = 0x4, scoped, tag = 'scoped memory for tpu_custom_call.1']
    #allocation4 [shape = 's32[1]{0}', space=sflag, size = 0x4, scoped, tag = 'scoped memory for tpu_custom_call.1']
    #allocation5 [shape = 'u8[8192]{0}', space=vmem, size = 0x2000, scoped, tag = 'output window, operand 0, single buffered']
    %12 = vsyncpa [#allocation3], 0
    %13 = vsyncpa [#allocation4], 0
    // Predicated region
    $region2: #{tpu_custom_call.1} parent=1 // pred_check
      _
    $region3: #{tpu_custom_call.1} parent=1 // pred_check_branch
      %15 = sbr.rel (0) target = $region5
    $region4: #{tpu_custom_call.1} parent=1 // pred_region
      %s17 = ssub.s32 256, 256
      %18 = vsyncadd [#allocation3], %s17
      %s19 = sshll.u32 [#allocation2], 4
      %s20 = int_to_ptr.vmem [resolvable:$true] %s19
      %25 = dma.hbm_to_vmem [thread:$0]  %s0, 256, %s20, [#allocation3], 128, 128, 8
    $region5: #{tpu_custom_call.1} parent=1 // pred_fallthru
      _
    // Predicated region
    $region6: #{tpu_custom_call.1} parent=1 // pred_check
      _
    $region7: #{tpu_custom_call.1} parent=1 // pred_check_branch
      %27 = sbr.rel (0) target = $region9
    $region8: #{tpu_custom_call.1} parent=1 // pred_region
      _
    $region9: #{tpu_custom_call.1} parent=1 // pred_fallthru
      _
    // Predicated region
    $region10: #{tpu_custom_call.1} parent=1 // pred_check
      _
    $region11: #{tpu_custom_call.1} parent=1 // pred_check_branch
      %29 = sbr.rel (0) target = $region13
    $region12: #{tpu_custom_call.1} parent=1 // pred_region
      _
    $region13: #{tpu_custom_call.1} parent=1 // pred_fallthru
      _
    // Predicated region
    $region14: #{tpu_custom_call.1} parent=1 // pred_check
      _
    $region15: #{tpu_custom_call.1} parent=1 // pred_check_branch
      %31 = sbr.rel (0) target = $region17
    $region16: #{tpu_custom_call.1} parent=1 // pred_region
      _
    $region17: #{tpu_custom_call.1} parent=1 // pred_fallthru
      _
    // Predicated region
    $region18: #{tpu_custom_call.1} parent=1 // pred_check
      _
    $region19: #{tpu_custom_call.1} parent=1 // pred_check_branch
      %33 = sbr.rel (0) target = $region21
    $region20: #{tpu_custom_call.1} parent=1 // pred_region
      _
    $region21: #{tpu_custom_call.1} parent=1 // pred_fallthru
      _
    // Predicated region
    $region22: #{tpu_custom_call.1} parent=1 // pred_check
      _
    $region23: #{tpu_custom_call.1} parent=1 // pred_check_branch
      %35 = sbr.rel (0) target = $region25
    $region24: #{tpu_custom_call.1} parent=1 // pred_region
      _
    $region25: #{tpu_custom_call.1} parent=1 // pred_fallthru
      _
    // Predicated region
    $region26: #{tpu_custom_call.1} parent=1 // pred_check
      _
    $region27: #{tpu_custom_call.1} parent=1 // pred_check_branch
      %37 = sbr.rel (0) target = $region29
    $region28: #{tpu_custom_call.1} parent=1 // pred_region
      _
    $region29: #{tpu_custom_call.1} parent=1 // pred_fallthru
      _
    // Predicated region
    $region30: #{tpu_custom_call.1} parent=1 // pred_check
      _
    $region31: #{tpu_custom_call.1} parent=1 // pred_check_branch
      %39 = sbr.rel (0) target = $region33
    $region32: #{tpu_custom_call.1} parent=1 // pred_region
      %40 = dma.done [#allocation3], 256
    $region33: #{tpu_custom_call.1} parent=1 // pred_fallthru
      _
    %v41 = vld [vmem:[#allocation2] sm:$0xff]
    %v42 = vld [vmem:[#allocation2 + $0x8] sm:$0xff]
    %v43 = vld [vmem:[%s1] sm:$0xff]
    %v44 = vld [vmem:[%s1 + $0x8] sm:$0xff]
    %v45 = vld [vmem:[%s1 + $0x10] sm:$0xff]
    %v46 = vld [vmem:[%s1 + $0x18] sm:$0xff]
    %vm47 = vcmask 261120
    %v49 = vsel %vm47, %v41, 0
    %v52 = vsel %vm47, %v42, 0
    %54 = vmatprep.subr.mxu0 0.0
    %55 = vmatpush1.msra.mxu0 %v43
    %56 = vmatprep.subr.mxu0 0.0
    %57 = vmatpush1.msra.mxu0 %v44
    %58 = vmatprep.subr.mxu0 0.0
    %59 = vmatpush1.msra.mxu0 %v45
    %60 = vmatprep.subr.mxu0 0.0
    %61 = vmatpush1.msra.mxu0 %v46
    %62 = vmatprep.subr.mxu0 0.0
    %63 = vmatpush1.msra.mxu0 0.0
    %64 = vmatprep.subr.mxu0 0.0
    %65 = vmatpush1.msra.mxu0 0.0
    %66 = vmatprep.subr.mxu0 0.0
    %67 = vmatpush1.msra.mxu0 0.0
    %68 = vmatprep.subr.mxu0 0.0
    %69 = vmatpush1.msra.mxu0 0.0
    %70 = vmatprep.subr.mxu0 0.0
    %71 = vmatpush1.msra.mxu0 0.0
    %72 = vmatprep.subr.mxu0 0.0
    %73 = vmatpush1.msra.mxu0 0.0
    %74 = vmatprep.subr.mxu0 0.0
    %75 = vmatpush1.msra.mxu0 0.0
    %76 = vmatprep.subr.mxu0 0.0
    %77 = vmatpush1.msra.mxu0 0.0
    %78 = vmatprep.subr.mxu0 0.0
    %79 = vmatpush1.msra.mxu0 0.0
    %80 = vmatprep.subr.mxu0 0.0
    %81 = vmatpush1.msra.mxu0 0.0
    %82 = vmatprep.subr.mxu0 0.0
    %83 = vmatpush1.msra.mxu0 0.0
    %84 = vmatprep.subr.mxu0 0.0
    %85 = vmatpush1.msra.mxu0 0.0
    %86 = vmatprep.subr.mxu0 0.0
    %87 = vmatpush1.msra.mxu0 0.0
    %88 = vmatprep.subr.mxu0 0.0
    %89 = vmatpush1.msra.mxu0 0.0
    %90 = vmatprep.subr.mxu0 0.0
    %91 = vmatpush1.msra.mxu0 0.0
    %92 = vmatprep.subr.mxu0 0.0
    %93 = vmatpush1.msra.mxu0 0.0
    %94 = vmatprep.subr.mxu0 0.0
    %95 = vmatpush1.msra.mxu0 0.0
    %96 = vmatprep.subr.mxu0 0.0
    %97 = vmatpush1.msra.mxu0 0.0
    %98 = vmatprep.subr.mxu0 0.0
    %99 = vmatpush1.msra.mxu0 0.0
    %100 = vmatprep.subr.mxu0 0.0
    %101 = vmatpush1.msra.mxu0 0.0
    %102 = vmatprep.subr.mxu0 0.0
    %103 = vmatpush1.msra.mxu0 0.0
    %104 = vmatprep.subr.mxu0 0.0
    %105 = vmatpush1.msra.mxu0 0.0
    %106 = vmatprep.subr.mxu0 0.0
    %107 = vmatpush1.msra.mxu0 0.0
    %108 = vmatprep.subr.mxu0 0.0
    %109 = vmatpush1.msra.mxu0 0.0
    %110 = vmatprep.subr.mxu0 0.0
    %111 = vmatpush1.msra.mxu0 0.0
    %112 = vmatprep.subr.mxu0 0.0
    %113 = vmatpush1.msra.mxu0 0.0
    %114 = vmatprep.subr.mxu0 0.0
    %115 = vmatpush1.msra.mxu0 0.0
    %116 = vmatprep.subr.mxu0 0.0
    %117 = vmatpush1.msra.mxu0 0.0
    %118 = vmatprep.mubr.f32.mxu0 0.0
    %119 = vmatmul.mubr.f32.gmra.mrb[0].mxu0 %v49
    %v120 = vpop.f32.mrb[0].mxu0
    %v121 = vadd.f32 0.0, %v120
    %v122 = vpop.f32.mrb[0].mxu0
    %123 = vmatprep.mubr.f32.mxu0 0.0
    %124 = vmatmul.mubr.f32.gmra.mrb[0].mxu0 %v52
    %v125 = vpop.f32.mrb[0].mxu0
    %v126 = vadd.f32 0.0, %v125
    %v127 = vpop.f32.mrb[0].mxu0
    %128 = vdwg.mxu0
    %v129 = vld [vmem:[%s3] sm:$0x1]
    %v130 = vld [vmem:[%s5] sm:$0x1]
    %v131 = vld [vmem:[%s2] sm:$0xff]
    %v132 = vld [vmem:[%s2 + $0x8] sm:$0xff]
    %v133 = vld [vmem:[%s2 + $0x10] sm:$0xff]
    %v134 = vld [vmem:[%s2 + $0x18] sm:$0xff]
    %v136 = vlaneseq
    %v137 = vshrl.u32 %v136, 7
    %v138 = vsub.s32 0, %v137
    %v139 = vrot.slane %v129, %v138
    %v142 = vsel %vm47, %v121, 0
    %v145 = vsel %vm47, %v126, 0
    %147 = vmatprep.subr.mxu0 0.0
    %148 = vmatpush1.msra.mxu0 %v131
    %149 = vmatprep.subr.mxu0 0.0
    %150 = vmatpush1.msra.mxu0 %v132
    %151 = vmatprep.subr.mxu0 0.0
    %152 = vmatpush1.msra.mxu0 %v133
    %153 = vmatprep.subr.mxu0 0.0
    %154 = vmatpush1.msra.mxu0 %v134
    %155 = vmatprep.subr.mxu0 0.0
    %156 = vmatpush1.msra.mxu0 0.0
    %157 = vmatprep.subr.mxu0 0.0
    %158 = vmatpush1.msra.mxu0 0.0
    %159 = vmatprep.subr.mxu0 0.0
    %160 = vmatpush1.msra.mxu0 0.0
    %161 = vmatprep.subr.mxu0 0.0
    %162 = vmatpush1.msra.mxu0 0.0
    %163 = vmatprep.subr.mxu0 0.0
    %164 = vmatpush1.msra.mxu0 0.0
    %165 = vmatprep.subr.mxu0 0.0
    %166 = vmatpush1.msra.mxu0 0.0
    %167 = vmatprep.subr.mxu0 0.0
    %168 = vmatpush1.msra.mxu0 0.0
    %169 = vmatprep.subr.mxu0 0.0
    %170 = vmatpush1.msra.mxu0 0.0
    %171 = vmatprep.subr.mxu0 0.0
    %172 = vmatpush1.msra.mxu0 0.0
    %173 = vmatprep.subr.mxu0 0.0
    %174 = vmatpush1.msra.mxu0 0.0
    %175 = vmatprep.subr.mxu0 0.0
    %176 = vmatpush1.msra.mxu0 0.0
    %177 = vmatprep.subr.mxu0 0.0
    %178 = vmatpush1.msra.mxu0 0.0
    %179 = vmatprep.subr.mxu0 0.0
    %180 = vmatpush1.msra.mxu0 0.0
    %181 = vmatprep.subr.mxu0 0.0
    %182 = vmatpush1.msra.mxu0 0.0
    %183 = vmatprep.subr.mxu0 0.0
    %184 = vmatpush1.msra.mxu0 0.0
    %185 = vmatprep.subr.mxu0 0.0
    %186 = vmatpush1.msra.mxu0 0.0
    %187 = vmatprep.subr.mxu0 0.0
    %188 = vmatpush1.msra.mxu0 0.0
    %189 = vmatprep.subr.mxu0 0.0
    %190 = vmatpush1.msra.mxu0 0.0
    %191 = vmatprep.subr.mxu0 0.0
    %192 = vmatpush1.msra.mxu0 0.0
    %193 = vmatprep.subr.mxu0 0.0
    %194 = vmatpush1.msra.mxu0 0.0
    %195 = vmatprep.subr.mxu0 0.0
    %196 = vmatpush1.msra.mxu0 0.0
    %197 = vmatprep.subr.mxu0 0.0
    %198 = vmatpush1.msra.mxu0 0.0
    %199 = vmatprep.subr.mxu0 0.0
    %200 = vmatpush1.msra.mxu0 0.0
    %201 = vmatprep.subr.mxu0 0.0
    %202 = vmatpush1.msra.mxu0 0.0
    %203 = vmatprep.subr.mxu0 0.0
    %204 = vmatpush1.msra.mxu0 0.0
    %205 = vmatprep.subr.mxu0 0.0
    %206 = vmatpush1.msra.mxu0 0.0
    %207 = vmatprep.subr.mxu0 0.0
    %208 = vmatpush1.msra.mxu0 0.0
    %209 = vmatprep.subr.mxu0 0.0
    %210 = vmatpush1.msra.mxu0 0.0
    %211 = vmatprep.mubr.f32.mxu0 0.0
    %212 = vmatmul.mubr.f32.gmra.mrb[0].mxu0 %v142
    %v213 = vpop.f32.mrb[0].mxu0
    %v214 = vadd.f32 %v139, %v213
    %v215 = vpop.f32.mrb[0].mxu0
    %216 = vmatprep.mubr.f32.mxu0 0.0
    %217 = vmatmul.mubr.f32.gmra.mrb[0].mxu0 %v145
    %v218 = vpop.f32.mrb[0].mxu0
    %v219 = vadd.f32 %v139, %v218
    %v220 = vpop.f32.mrb[0].mxu0
    %221 = vdwg.mxu0
    %v222 = vmax.f32 %v214, 0.0
    %v223 = vmax.f32 %v219, 0.0
    %v224 = vld [vmem:[%s4] sm:$0xff]
    %v225 = vld [vmem:[%s4 + $0x8] sm:$0xff]
    %v226 = vld [vmem:[%s4 + $0x10] sm:$0xff]
    %v227 = vld [vmem:[%s4 + $0x18] sm:$0xff]
    %v228 = vld [vmem:[%s4 + $0x20] sm:$0xff]
    %v229 = vld [vmem:[%s4 + $0x28] sm:$0xff]
    %v230 = vld [vmem:[%s4 + $0x30] sm:$0xff]
    %v231 = vld [vmem:[%s4 + $0x38] sm:$0xff]
    %v233 = vlaneseq
    %v234 = vshrl.u32 %v233, 7
    %v235 = vsub.s32 0, %v234
    %v236 = vrot.slane %v130, %v235
    %vm238 = vcmask 523264
    %v240 = vsel %vm238, %v222, 0
    %v243 = vsel %vm238, %v223, 0
    %245 = vmatprep.subr.mxu0 0.0
    %246 = vmatpush1.msra.mxu0 %v224
    %247 = vmatprep.subr.mxu0 0.0
    %248 = vmatpush1.msra.mxu0 %v225
    %249 = vmatprep.subr.mxu0 0.0
    %250 = vmatpush1.msra.mxu0 %v226
    %251 = vmatprep.subr.mxu0 0.0
    %252 = vmatpush1.msra.mxu0 %v227
    %253 = vmatprep.subr.mxu0 0.0
    %254 = vmatpush1.msra.mxu0 %v228
    %255 = vmatprep.subr.mxu0 0.0
    %256 = vmatpush1.msra.mxu0 %v229
    %257 = vmatprep.subr.mxu0 0.0
    %258 = vmatpush1.msra.mxu0 %v230
    %259 = vmatprep.subr.mxu0 0.0
    %260 = vmatpush1.msra.mxu0 %v231
    %261 = vmatprep.subr.mxu0 0.0
    %262 = vmatpush1.msra.mxu0 0.0
    %263 = vmatprep.subr.mxu0 0.0
    %264 = vmatpush1.msra.mxu0 0.0
    %265 = vmatprep.subr.mxu0 0.0
    %266 = vmatpush1.msra.mxu0 0.0
    %267 = vmatprep.subr.mxu0 0.0
    %268 = vmatpush1.msra.mxu0 0.0
    %269 = vmatprep.subr.mxu0 0.0
    %270 = vmatpush1.msra.mxu0 0.0
    %271 = vmatprep.subr.mxu0 0.0
    %272 = vmatpush1.msra.mxu0 0.0
    %273 = vmatprep.subr.mxu0 0.0
    %274 = vmatpush1.msra.mxu0 0.0
    %275 = vmatprep.subr.mxu0 0.0
    %276 = vmatpush1.msra.mxu0 0.0
    %277 = vmatprep.subr.mxu0 0.0
    %278 = vmatpush1.msra.mxu0 0.0
    %279 = vmatprep.subr.mxu0 0.0
    %280 = vmatpush1.msra.mxu0 0.0
    %281 = vmatprep.subr.mxu0 0.0
    %282 = vmatpush1.msra.mxu0 0.0
    %283 = vmatprep.subr.mxu0 0.0
    %284 = vmatpush1.msra.mxu0 0.0
    %285 = vmatprep.subr.mxu0 0.0
    %286 = vmatpush1.msra.mxu0 0.0
    %287 = vmatprep.subr.mxu0 0.0
    %288 = vmatpush1.msra.mxu0 0.0
    %289 = vmatprep.subr.mxu0 0.0
    %290 = vmatpush1.msra.mxu0 0.0
    %291 = vmatprep.subr.mxu0 0.0
    %292 = vmatpush1.msra.mxu0 0.0
    %293 = vmatprep.subr.mxu0 0.0
    %294 = vmatpush1.msra.mxu0 0.0
    %295 = vmatprep.subr.mxu0 0.0
    %296 = vmatpush1.msra.mxu0 0.0
    %297 = vmatprep.subr.mxu0 0.0
    %298 = vmatpush1.msra.mxu0 0.0
    %299 = vmatprep.subr.mxu0 0.0
    %300 = vmatpush1.msra.mxu0 0.0
    %301 = vmatprep.subr.mxu0 0.0
    %302 = vmatpush1.msra.mxu0 0.0
    %303 = vmatprep.subr.mxu0 0.0
    %304 = vmatpush1.msra.mxu0 0.0
    %305 = vmatprep.subr.mxu0 0.0
    %306 = vmatpush1.msra.mxu0 0.0
    %307 = vmatprep.subr.mxu0 0.0
    %308 = vmatpush1.msra.mxu0 0.0
    %309 = vmatprep.mubr.f32.mxu0 0.0
    %310 = vmatmul.mubr.f32.gmra.mrb[0].mxu0 %v240
    %v311 = vpop.f32.mrb[0].mxu0
    %v312 = vadd.f32 %v236, %v311
    %v313 = vpop.f32.mrb[0].mxu0
    %314 = vmatprep.mubr.f32.mxu0 0.0
    %315 = vmatmul.mubr.f32.gmra.mrb[0].mxu0 %v243
    %v316 = vpop.f32.mrb[0].mxu0
    %v317 = vadd.f32 %v236, %v316
    %v318 = vpop.f32.mrb[0].mxu0
    %319 = vdwg.mxu0
    %320 = vrot.lane.b32.xlu0 %v121, 96
    %v321 = vpop.permute.xlu0 %320
    %322 = vrot.lane.b32.xlu0 %v126, 96
    %v323 = vpop.permute.xlu0 %322
    %v324 = vsel %vm47, %v321, 0
    %v326 = vsel %vm47, %v323, 0
    %328 = vmatprep.subr.mxu0 0.0
    %329 = vmatpush1.msra.mxu0 %v131
    %330 = vmatprep.subr.mxu0 0.0
    %331 = vmatpush1.msra.mxu0 %v132
    %332 = vmatprep.subr.mxu0 0.0
    %333 = vmatpush1.msra.mxu0 %v133
    %334 = vmatprep.subr.mxu0 0.0
    %335 = vmatpush1.msra.mxu0 %v134
    %336 = vmatprep.subr.mxu0 0.0
    %337 = vmatpush1.msra.mxu0 0.0
    %338 = vmatprep.subr.mxu0 0.0
    %339 = vmatpush1.msra.mxu0 0.0
    %340 = vmatprep.subr.mxu0 0.0
    %341 = vmatpush1.msra.mxu0 0.0
    %342 = vmatprep.subr.mxu0 0.0
    %343 = vmatpush1.msra.mxu0 0.0
    %344 = vmatprep.subr.mxu0 0.0
    %345 = vmatpush1.msra.mxu0 0.0
    %346 = vmatprep.subr.mxu0 0.0
    %347 = vmatpush1.msra.mxu0 0.0
    %348 = vmatprep.subr.mxu0 0.0
    %349 = vmatpush1.msra.mxu0 0.0
    %350 = vmatprep.subr.mxu0 0.0
    %351 = vmatpush1.msra.mxu0 0.0
    %352 = vmatprep.subr.mxu0 0.0
    %353 = vmatpush1.msra.mxu0 0.0
    %354 = vmatprep.subr.mxu0 0.0
    %355 = vmatpush1.msra.mxu0 0.0
    %356 = vmatprep.subr.mxu0 0.0
    %357 = vmatpush1.msra.mxu0 0.0
    %358 = vmatprep.subr.mxu0 0.0
    %359 = vmatpush1.msra.mxu0 0.0
    %360 = vmatprep.subr.mxu0 0.0
    %361 = vmatpush1.msra.mxu0 0.0
    %362 = vmatprep.subr.mxu0 0.0
    %363 = vmatpush1.msra.mxu0 0.0
    %364 = vmatprep.subr.mxu0 0.0
    %365 = vmatpush1.msra.mxu0 0.0
    %366 = vmatprep.subr.mxu0 0.0
    %367 = vmatpush1.msra.mxu0 0.0
    %368 = vmatprep.subr.mxu0 0.0
    %369 = vmatpush1.msra.mxu0 0.0
    %370 = vmatprep.subr.mxu0 0.0
    %371 = vmatpush1.msra.mxu0 0.0
    %372 = vmatprep.subr.mxu0 0.0
    %373 = vmatpush1.msra.mxu0 0.0
    %374 = vmatprep.subr.mxu0 0.0
    %375 = vmatpush1.msra.mxu0 0.0
    %376 = vmatprep.subr.mxu0 0.0
    %377 = vmatpush1.msra.mxu0 0.0
    %378 = vmatprep.subr.mxu0 0.0
    %379 = vmatpush1.msra.mxu0 0.0
    %380 = vmatprep.subr.mxu0 0.0
    %381 = vmatpush1.msra.mxu0 0.0
    %382 = vmatprep.subr.mxu0 0.0
    %383 = vmatpush1.msra.mxu0 0.0
    %384 = vmatprep.subr.mxu0 0.0
    %385 = vmatpush1.msra.mxu0 0.0
    %386 = vmatprep.subr.mxu0 0.0
    %387 = vmatpush1.msra.mxu0 0.0
    %388 = vmatprep.subr.mxu0 0.0
    %389 = vmatpush1.msra.mxu0 0.0
    %390 = vmatprep.subr.mxu0 0.0
    %391 = vmatpush1.msra.mxu0 0.0
    %392 = vmatprep.mubr.f32.mxu0 0.0
    %393 = vmatmul.mubr.f32.gmra.mrb[0].mxu0 %v324
    %v394 = vpop.f32.mrb[0].mxu0
    %v395 = vadd.f32 %v139, %v394
    %v396 = vpop.f32.mrb[0].mxu0
    %397 = vmatprep.mubr.f32.mxu0 0.0
    %398 = vmatmul.mubr.f32.gmra.mrb[0].mxu0 %v326
    %v399 = vpop.f32.mrb[0].mxu0
    %v400 = vadd.f32 %v139, %v399
    %v401 = vpop.f32.mrb[0].mxu0
    %402 = vdwg.mxu0
    %v403 = vmax.f32 %v395, 0.0
    %v404 = vmax.f32 %v400, 0.0
    %v406 = vsel %vm238, %v403, 0
    %v409 = vsel %vm238, %v404, 0
    %411 = vmatprep.subr.mxu0 0.0
    %412 = vmatpush1.msra.mxu0 %v224
    %413 = vmatprep.subr.mxu0 0.0
    %414 = vmatpush1.msra.mxu0 %v225
    %415 = vmatprep.subr.mxu0 0.0
    %416 = vmatpush1.msra.mxu0 %v226
    %417 = vmatprep.subr.mxu0 0.0
    %418 = vmatpush1.msra.mxu0 %v227
    %419 = vmatprep.subr.mxu0 0.0
    %420 = vmatpush1.msra.mxu0 %v228
    %421 = vmatprep.subr.mxu0 0.0
    %422 = vmatpush1.msra.mxu0 %v229
    %423 = vmatprep.subr.mxu0 0.0
    %424 = vmatpush1.msra.mxu0 %v230
    %425 = vmatprep.subr.mxu0 0.0
    %426 = vmatpush1.msra.mxu0 %v231
    %427 = vmatprep.subr.mxu0 0.0
    %428 = vmatpush1.msra.mxu0 0.0
    %429 = vmatprep.subr.mxu0 0.0
    %430 = vmatpush1.msra.mxu0 0.0
    %431 = vmatprep.subr.mxu0 0.0
    %432 = vmatpush1.msra.mxu0 0.0
    %433 = vmatprep.subr.mxu0 0.0
    %434 = vmatpush1.msra.mxu0 0.0
    %435 = vmatprep.subr.mxu0 0.0
    %436 = vmatpush1.msra.mxu0 0.0
    %437 = vmatprep.subr.mxu0 0.0
    %438 = vmatpush1.msra.mxu0 0.0
    %439 = vmatprep.subr.mxu0 0.0
    %440 = vmatpush1.msra.mxu0 0.0
    %441 = vmatprep.subr.mxu0 0.0
    %442 = vmatpush1.msra.mxu0 0.0
    %443 = vmatprep.subr.mxu0 0.0
    %444 = vmatpush1.msra.mxu0 0.0
    %445 = vmatprep.subr.mxu0 0.0
    %446 = vmatpush1.msra.mxu0 0.0
    %447 = vmatprep.subr.mxu0 0.0
    %448 = vmatpush1.msra.mxu0 0.0
    %449 = vmatprep.subr.mxu0 0.0
    %450 = vmatpush1.msra.mxu0 0.0
    %451 = vmatprep.subr.mxu0 0.0
    %452 = vmatpush1.msra.mxu0 0.0
    %453 = vmatprep.subr.mxu0 0.0
    %454 = vmatpush1.msra.mxu0 0.0
    %455 = vmatprep.subr.mxu0 0.0
    %456 = vmatpush1.msra.mxu0 0.0
    %457 = vmatprep.subr.mxu0 0.0
    %458 = vmatpush1.msra.mxu0 0.0
    %459 = vmatprep.subr.mxu0 0.0
    %460 = vmatpush1.msra.mxu0 0.0
    %461 = vmatprep.subr.mxu0 0.0
    %462 = vmatpush1.msra.mxu0 0.0
    %463 = vmatprep.subr.mxu0 0.0
    %464 = vmatpush1.msra.mxu0 0.0
    %465 = vmatprep.subr.mxu0 0.0
    %466 = vmatpush1.msra.mxu0 0.0
    %467 = vmatprep.subr.mxu0 0.0
    %468 = vmatpush1.msra.mxu0 0.0
    %469 = vmatprep.subr.mxu0 0.0
    %470 = vmatpush1.msra.mxu0 0.0
    %471 = vmatprep.subr.mxu0 0.0
    %472 = vmatpush1.msra.mxu0 0.0
    %473 = vmatprep.subr.mxu0 0.0
    %474 = vmatpush1.msra.mxu0 0.0
    %475 = vmatprep.mubr.f32.mxu0 0.0
    %476 = vmatmul.mubr.f32.gmra.mrb[0].mxu0 %v406
    %v477 = vpop.f32.mrb[0].mxu0
    %v478 = vadd.f32 %v236, %v477
    %v479 = vpop.f32.mrb[0].mxu0
    %480 = vmatprep.mubr.f32.mxu0 0.0
    %481 = vmatmul.mubr.f32.gmra.mrb[0].mxu0 %v409
    %v482 = vpop.f32.mrb[0].mxu0
    %v483 = vadd.f32 %v236, %v482
    %v484 = vpop.f32.mrb[0].mxu0
    %485 = vdwg.mxu0
    %486 = vxpose.xlu0.b32.start [1/16] %v478, 128
    %487 = vxpose.xlu0.b32.cont [2/16] 0.0, 128
    %488 = vxpose.xlu0.b32.cont [3/16] 0.0, 128
    %489 = vxpose.xlu0.b32.cont [4/16] 0.0, 128
    %490 = vxpose.xlu0.b32.cont [5/16] 0.0, 128
    %491 = vxpose.xlu0.b32.cont [6/16] 0.0, 128
    %492 = vxpose.xlu0.b32.cont [7/16] 0.0, 128
    %493 = vxpose.xlu0.b32.cont [8/16] 0.0, 128
    %494 = vxpose.xlu0.b32.cont [9/16] 0.0, 128
    %495 = vxpose.xlu0.b32.cont [10/16] 0.0, 128
    %496 = vxpose.xlu0.b32.cont [11/16] 0.0, 128
    %497 = vxpose.xlu0.b32.cont [12/16] 0.0, 128
    %498 = vxpose.xlu0.b32.cont [13/16] 0.0, 128
    %499 = vxpose.xlu0.b32.cont [14/16] 0.0, 128
    %500 = vxpose.xlu0.b32.cont [15/16] 0.0, 128
    %501 = vxpose.xlu0.b32.end [16/16] 0.0, 128
    %v502 = vpop.trf.xlu0
    %v503 = vpop.trf.xlu0
    %v504 = vpop.trf.xlu0
    %v505 = vpop.trf.xlu0
    %v506 = vpop.trf.xlu0
    %v507 = vpop.trf.xlu0
    %v508 = vpop.trf.xlu0
    %v509 = vpop.trf.xlu0
    %v510 = vpop.trf.xlu0
    %v511 = vpop.trf.xlu0
    %v512 = vpop.trf.xlu0
    %v513 = vpop.trf.xlu0
    %v514 = vpop.trf.xlu0
    %v515 = vpop.trf.xlu0
    %v516 = vpop.trf.xlu0
    %v517 = vpop.trf.xlu0
    %518 = vrot.lane.b32.xlu0 %v121, 64
    %v519 = vpop.permute.xlu0 %518
    %vm521 = vcmask 64512
    %v523 = vsel %vm521, %v502, 0
    %525 = vmatprep.subr.mxu0 0.0
    %526 = vmatpush1.msra.mxu0 %v519
    %527 = vmatprep.subr.mxu0 0.0
    %528 = vmatpush1.msra.mxu0 0.0
    %529 = vmatprep.subr.mxu0 0.0
    %530 = vmatpush1.msra.mxu0 0.0
    %531 = vmatprep.subr.mxu0 0.0
    %532 = vmatpush1.msra.mxu0 0.0
    %533 = vmatprep.subr.mxu0 0.0
    %534 = vmatpush1.msra.mxu0 0.0
    %535 = vmatprep.subr.mxu0 0.0
    %536 = vmatpush1.msra.mxu0 0.0
    %537 = vmatprep.subr.mxu0 0.0
    %538 = vmatpush1.msra.mxu0 0.0
    %539 = vmatprep.subr.mxu0 0.0
    %540 = vmatpush1.msra.mxu0 0.0
    %541 = vmatprep.subr.mxu0 0.0
    %542 = vmatpush1.msra.mxu0 0.0
    %543 = vmatprep.subr.mxu0 0.0
    %544 = vmatpush1.msra.mxu0 0.0
    %545 = vmatprep.subr.mxu0 0.0
    %546 = vmatpush1.msra.mxu0 0.0
    %547 = vmatprep.subr.mxu0 0.0
    %548 = vmatpush1.msra.mxu0 0.0
    %549 = vmatprep.subr.mxu0 0.0
    %550 = vmatpush1.msra.mxu0 0.0
    %551 = vmatprep.subr.mxu0 0.0
    %552 = vmatpush1.msra.mxu0 0.0
    %553 = vmatprep.subr.mxu0 0.0
    %554 = vmatpush1.msra.mxu0 0.0
    %555 = vmatprep.subr.mxu0 0.0
    %556 = vmatpush1.msra.mxu0 0.0
    %557 = vmatprep.subr.mxu0 0.0
    %558 = vmatpush1.msra.mxu0 0.0
    %559 = vmatprep.subr.mxu0 0.0
    %560 = vmatpush1.msra.mxu0 0.0
    %561 = vmatprep.subr.mxu0 0.0
    %562 = vmatpush1.msra.mxu0 0.0
    %563 = vmatprep.subr.mxu0 0.0
    %564 = vmatpush1.msra.mxu0 0.0
    %565 = vmatprep.subr.mxu0 0.0
    %566 = vmatpush1.msra.mxu0 0.0
    %567 = vmatprep.subr.mxu0 0.0
    %568 = vmatpush1.msra.mxu0 0.0
    %569 = vmatprep.subr.mxu0 0.0
    %570 = vmatpush1.msra.mxu0 0.0
    %571 = vmatprep.subr.mxu0 0.0
    %572 = vmatpush1.msra.mxu0 0.0
    %573 = vmatprep.subr.mxu0 0.0
    %574 = vmatpush1.msra.mxu0 0.0
    %575 = vmatprep.subr.mxu0 0.0
    %576 = vmatpush1.msra.mxu0 0.0
    %577 = vmatprep.subr.mxu0 0.0
    %578 = vmatpush1.msra.mxu0 0.0
    %579 = vmatprep.subr.mxu0 0.0
    %580 = vmatpush1.msra.mxu0 0.0
    %581 = vmatprep.subr.mxu0 0.0
    %582 = vmatpush1.msra.mxu0 0.0
    %583 = vmatprep.subr.mxu0 0.0
    %584 = vmatpush1.msra.mxu0 0.0
    %585 = vmatprep.subr.mxu0 0.0
    %586 = vmatpush1.msra.mxu0 0.0
    %587 = vmatprep.subr.mxu0 0.0
    %588 = vmatpush1.msra.mxu0 0.0
    %589 = vmatprep.mubr.f32.mxu0 0.0
    %590 = vmatmul.mubr.f32.gmra.mrb[0].mxu0 %v523
    %v591 = vpop.f32.mrb[0].mxu0
    %v592 = vadd.f32 0.0, %v591
    %v593 = vpop.f32.mrb[0].mxu0
    %594 = vdwg.mxu0
    %595 = vxpose.xlu0.b32.start [1/16] %v483, 128
    %596 = vxpose.xlu0.b32.cont [2/16] 0.0, 128
    %597 = vxpose.xlu0.b32.cont [3/16] 0.0, 128
    %598 = vxpose.xlu0.b32.cont [4/16] 0.0, 128
    %599 = vxpose.xlu0.b32.cont [5/16] 0.0, 128
    %600 = vxpose.xlu0.b32.cont [6/16] 0.0, 128
    %601 = vxpose.xlu0.b32.cont [7/16] 0.0, 128
    %602 = vxpose.xlu0.b32.cont [8/16] 0.0, 128
    %603 = vxpose.xlu0.b32.cont [9/16] 0.0, 128
    %604 = vxpose.xlu0.b32.cont [10/16] 0.0, 128
    %605 = vxpose.xlu0.b32.cont [11/16] 0.0, 128
    %606 = vxpose.xlu0.b32.cont [12/16] 0.0, 128
    %607 = vxpose.xlu0.b32.cont [13/16] 0.0, 128
    %608 = vxpose.xlu0.b32.cont [14/16] 0.0, 128
    %609 = vxpose.xlu0.b32.cont [15/16] 0.0, 128
    %610 = vxpose.xlu0.b32.end [16/16] 0.0, 128
    %v611 = vpop.trf.xlu0
    %v612 = vpop.trf.xlu0
    %v613 = vpop.trf.xlu0
    %v614 = vpop.trf.xlu0
    %v615 = vpop.trf.xlu0
    %v616 = vpop.trf.xlu0
    %v617 = vpop.trf.xlu0
    %v618 = vpop.trf.xlu0
    %v619 = vpop.trf.xlu0
    %v620 = vpop.trf.xlu0
    %v621 = vpop.trf.xlu0
    %v622 = vpop.trf.xlu0
    %v623 = vpop.trf.xlu0
    %v624 = vpop.trf.xlu0
    %v625 = vpop.trf.xlu0
    %v626 = vpop.trf.xlu0
    %627 = vrot.lane.b32.xlu0 %v126, 64
    %v628 = vpop.permute.xlu0 %627
    %v631 = vsel %vm521, %v611, 0
    %633 = vmatprep.subr.mxu0 0.0
    %634 = vmatpush1.msra.mxu0 %v628
    %635 = vmatprep.subr.mxu0 0.0
    %636 = vmatpush1.msra.mxu0 0.0
    %637 = vmatprep.subr.mxu0 0.0
    %638 = vmatpush1.msra.mxu0 0.0
    %639 = vmatprep.subr.mxu0 0.0
    %640 = vmatpush1.msra.mxu0 0.0
    %641 = vmatprep.subr.mxu0 0.0
    %642 = vmatpush1.msra.mxu0 0.0
    %643 = vmatprep.subr.mxu0 0.0
    %644 = vmatpush1.msra.mxu0 0.0
    %645 = vmatprep.subr.mxu0 0.0
    %646 = vmatpush1.msra.mxu0 0.0
    %647 = vmatprep.subr.mxu0 0.0
    %648 = vmatpush1.msra.mxu0 0.0
    %649 = vmatprep.subr.mxu0 0.0
    %650 = vmatpush1.msra.mxu0 0.0
    %651 = vmatprep.subr.mxu0 0.0
    %652 = vmatpush1.msra.mxu0 0.0
    %653 = vmatprep.subr.mxu0 0.0
    %654 = vmatpush1.msra.mxu0 0.0
    %655 = vmatprep.subr.mxu0 0.0
    %656 = vmatpush1.msra.mxu0 0.0
    %657 = vmatprep.subr.mxu0 0.0
    %658 = vmatpush1.msra.mxu0 0.0
    %659 = vmatprep.subr.mxu0 0.0
    %660 = vmatpush1.msra.mxu0 0.0
    %661 = vmatprep.subr.mxu0 0.0
    %662 = vmatpush1.msra.mxu0 0.0
    %663 = vmatprep.subr.mxu0 0.0
    %664 = vmatpush1.msra.mxu0 0.0
    %665 = vmatprep.subr.mxu0 0.0
    %666 = vmatpush1.msra.mxu0 0.0
    %667 = vmatprep.subr.mxu0 0.0
    %668 = vmatpush1.msra.mxu0 0.0
    %669 = vmatprep.subr.mxu0 0.0
    %670 = vmatpush1.msra.mxu0 0.0
    %671 = vmatprep.subr.mxu0 0.0
    %672 = vmatpush1.msra.mxu0 0.0
    %673 = vmatprep.subr.mxu0 0.0
    %674 = vmatpush1.msra.mxu0 0.0
    %675 = vmatprep.subr.mxu0 0.0
    %676 = vmatpush1.msra.mxu0 0.0
    %677 = vmatprep.subr.mxu0 0.0
    %678 = vmatpush1.msra.mxu0 0.0
    %679 = vmatprep.subr.mxu0 0.0
    %680 = vmatpush1.msra.mxu0 0.0
    %681 = vmatprep.subr.mxu0 0.0
    %682 = vmatpush1.msra.mxu0 0.0
    %683 = vmatprep.subr.mxu0 0.0
    %684 = vmatpush1.msra.mxu0 0.0
    %685 = vmatprep.subr.mxu0 0.0
    %686 = vmatpush1.msra.mxu0 0.0
    %687 = vmatprep.subr.mxu0 0.0
    %688 = vmatpush1.msra.mxu0 0.0
    %689 = vmatprep.subr.mxu0 0.0
    %690 = vmatpush1.msra.mxu0 0.0
    %691 = vmatprep.subr.mxu0 0.0
    %692 = vmatpush1.msra.mxu0 0.0
    %693 = vmatprep.subr.mxu0 0.0
    %694 = vmatpush1.msra.mxu0 0.0
    %695 = vmatprep.subr.mxu0 0.0
    %696 = vmatpush1.msra.mxu0 0.0
    %697 = vmatprep.mubr.f32.mxu0 0.0
    %698 = vmatmul.mubr.f32.gmra.mrb[0].mxu0 %v631
    %v699 = vpop.f32.mrb[0].mxu0
    %v700 = vadd.f32 0.0, %v699
    %v701 = vpop.f32.mrb[0].mxu0
    %702 = vdwg.mxu0
    %v704 = vsel %vm521, %v312, 0
    %706 = vmatprep.subr.mxu0 0.0
    %707 = vmatpush1.msra.mxu0 %v592
    %708 = vmatprep.subr.mxu0 0.0
    %709 = vmatpush1.msra.mxu0 0.0
    %710 = vmatprep.subr.mxu0 0.0
    %711 = vmatpush1.msra.mxu0 0.0
    %712 = vmatprep.subr.mxu0 0.0
    %713 = vmatpush1.msra.mxu0 0.0
    %714 = vmatprep.subr.mxu0 0.0
    %715 = vmatpush1.msra.mxu0 0.0
    %716 = vmatprep.subr.mxu0 0.0
    %717 = vmatpush1.msra.mxu0 0.0
    %718 = vmatprep.subr.mxu0 0.0
    %719 = vmatpush1.msra.mxu0 0.0
    %720 = vmatprep.subr.mxu0 0.0
    %721 = vmatpush1.msra.mxu0 0.0
    %722 = vmatprep.subr.mxu0 0.0
    %723 = vmatpush1.msra.mxu0 0.0
    %724 = vmatprep.subr.mxu0 0.0
    %725 = vmatpush1.msra.mxu0 0.0
    %726 = vmatprep.subr.mxu0 0.0
    %727 = vmatpush1.msra.mxu0 0.0
    %728 = vmatprep.subr.mxu0 0.0
    %729 = vmatpush1.msra.mxu0 0.0
    %730 = vmatprep.subr.mxu0 0.0
    %731 = vmatpush1.msra.mxu0 0.0
    %732 = vmatprep.subr.mxu0 0.0
    %733 = vmatpush1.msra.mxu0 0.0
    %734 = vmatprep.subr.mxu0 0.0
    %735 = vmatpush1.msra.mxu0 0.0
    %736 = vmatprep.subr.mxu0 0.0
    %737 = vmatpush1.msra.mxu0 0.0
    %738 = vmatprep.subr.mxu0 0.0
    %739 = vmatpush1.msra.mxu0 0.0
    %740 = vmatprep.subr.mxu0 0.0
    %741 = vmatpush1.msra.mxu0 0.0
    %742 = vmatprep.subr.mxu0 0.0
    %743 = vmatpush1.msra.mxu0 0.0
    %744 = vmatprep.subr.mxu0 0.0
    %745 = vmatpush1.msra.mxu0 0.0
    %746 = vmatprep.subr.mxu0 0.0
    %747 = vmatpush1.msra.mxu0 0.0
    %748 = vmatprep.subr.mxu0 0.0
    %749 = vmatpush1.msra.mxu0 0.0
    %750 = vmatprep.subr.mxu0 0.0
    %751 = vmatpush1.msra.mxu0 0.0
    %752 = vmatprep.subr.mxu0 0.0
    %753 = vmatpush1.msra.mxu0 0.0
    %754 = vmatprep.subr.mxu0 0.0
    %755 = vmatpush1.msra.mxu0 0.0
    %756 = vmatprep.subr.mxu0 0.0
    %757 = vmatpush1.msra.mxu0 0.0
    %758 = vmatprep.subr.mxu0 0.0
    %759 = vmatpush1.msra.mxu0 0.0
    %760 = vmatprep.subr.mxu0 0.0
    %761 = vmatpush1.msra.mxu0 0.0
    %762 = vmatprep.subr.mxu0 0.0
    %763 = vmatpush1.msra.mxu0 0.0
    %764 = vmatprep.subr.mxu0 0.0
    %765 = vmatpush1.msra.mxu0 0.0
    %766 = vmatprep.subr.mxu0 0.0
    %767 = vmatpush1.msra.mxu0 0.0
    %768 = vmatprep.subr.mxu0 0.0
    %769 = vmatpush1.msra.mxu0 0.0
    %770 = vmatprep.mubr.f32.mxu0 0.0
    %771 = vmatmul.mubr.f32.gmra.mrb[0].mxu0 %v704
    %v772 = vpop.f32.mrb[0].mxu0
    %v773 = vadd.f32 0.0, %v772
    %v774 = vpop.f32.mrb[0].mxu0
    %775 = vdwg.mxu0
    %v777 = vsel %vm521, %v317, 0
    %779 = vmatprep.subr.mxu0 0.0
    %780 = vmatpush1.msra.mxu0 %v700
    %781 = vmatprep.subr.mxu0 0.0
    %782 = vmatpush1.msra.mxu0 0.0
    %783 = vmatprep.subr.mxu0 0.0
    %784 = vmatpush1.msra.mxu0 0.0
    %785 = vmatprep.subr.mxu0 0.0
    %786 = vmatpush1.msra.mxu0 0.0
    %787 = vmatprep.subr.mxu0 0.0
    %788 = vmatpush1.msra.mxu0 0.0
    %789 = vmatprep.subr.mxu0 0.0
    %790 = vmatpush1.msra.mxu0 0.0
    %791 = vmatprep.subr.mxu0 0.0
    %792 = vmatpush1.msra.mxu0 0.0
    %793 = vmatprep.subr.mxu0 0.0
    %794 = vmatpush1.msra.mxu0 0.0
    %795 = vmatprep.subr.mxu0 0.0
    %796 = vmatpush1.msra.mxu0 0.0
    %797 = vmatprep.subr.mxu0 0.0
    %798 = vmatpush1.msra.mxu0 0.0
    %799 = vmatprep.subr.mxu0 0.0
    %800 = vmatpush1.msra.mxu0 0.0
    %801 = vmatprep.subr.mxu0 0.0
    %802 = vmatpush1.msra.mxu0 0.0
    %803 = vmatprep.subr.mxu0 0.0
    %804 = vmatpush1.msra.mxu0 0.0
    %805 = vmatprep.subr.mxu0 0.0
    %806 = vmatpush1.msra.mxu0 0.0
    %807 = vmatprep.subr.mxu0 0.0
    %808 = vmatpush1.msra.mxu0 0.0
    %809 = vmatprep.subr.mxu0 0.0
    %810 = vmatpush1.msra.mxu0 0.0
    %811 = vmatprep.subr.mxu0 0.0
    %812 = vmatpush1.msra.mxu0 0.0
    %813 = vmatprep.subr.mxu0 0.0
    %814 = vmatpush1.msra.mxu0 0.0
    %815 = vmatprep.subr.mxu0 0.0
    %816 = vmatpush1.msra.mxu0 0.0
    %817 = vmatprep.subr.mxu0 0.0
    %818 = vmatpush1.msra.mxu0 0.0
    %819 = vmatprep.subr.mxu0 0.0
    %820 = vmatpush1.msra.mxu0 0.0
    %821 = vmatprep.subr.mxu0 0.0
    %822 = vmatpush1.msra.mxu0 0.0
    %823 = vmatprep.subr.mxu0 0.0
    %824 = vmatpush1.msra.mxu0 0.0
    %825 = vmatprep.subr.mxu0 0.0
    %826 = vmatpush1.msra.mxu0 0.0
    %827 = vmatprep.subr.mxu0 0.0
    %828 = vmatpush1.msra.mxu0 0.0
    %829 = vmatprep.subr.mxu0 0.0
    %830 = vmatpush1.msra.mxu0 0.0
    %831 = vmatprep.subr.mxu0 0.0
    %832 = vmatpush1.msra.mxu0 0.0
    %833 = vmatprep.subr.mxu0 0.0
    %834 = vmatpush1.msra.mxu0 0.0
    %835 = vmatprep.subr.mxu0 0.0
    %836 = vmatpush1.msra.mxu0 0.0
    %837 = vmatprep.subr.mxu0 0.0
    %838 = vmatpush1.msra.mxu0 0.0
    %839 = vmatprep.subr.mxu0 0.0
    %840 = vmatpush1.msra.mxu0 0.0
    %841 = vmatprep.subr.mxu0 0.0
    %842 = vmatpush1.msra.mxu0 0.0
    %843 = vmatprep.mubr.f32.mxu0 0.0
    %844 = vmatmul.mubr.f32.gmra.mrb[0].mxu0 %v777
    %v845 = vpop.f32.mrb[0].mxu0
    %v846 = vadd.f32 0.0, %v845
    %v847 = vpop.f32.mrb[0].mxu0
    %848 = vdwg.mxu0
    %v849 = vsel %vm521, %v478, 0.0
    %v850 = vrot.slane %v849, 4
    %v851 = vadd.f32 %v849, %v850
    %v852 = vrot.slane %v851, 2
    %v853 = vadd.f32 %v851, %v852
    %v854 = vrot.slane %v853, 1
    %v855 = vadd.f32 %v853, %v854
    %v856 = vsel %vm521, %v483, 0.0
    %v857 = vrot.slane %v856, 4
    %v858 = vadd.f32 %v856, %v857
    %v859 = vrot.slane %v858, 2
    %v860 = vadd.f32 %v858, %v859
    %v861 = vrot.slane %v860, 1
    %v862 = vadd.f32 %v860, %v861
    %v863 = vmul.f32 %v312, %v855
    %v864 = vmul.f32 %v317, %v862
    %v865 = vsel %vm521, %v863, 0.0
    %866 = vadd.xlane.f32.xlu0 %v865
    %v867 = vpop.xlane.xlu0 %866
    %v868 = vsel %vm521, %v864, 0.0
    %869 = vadd.xlane.f32.xlu0 %v868
    %v870 = vpop.xlane.xlu0 %869
    %v871 = vadd.f32 %v867, 1e-08
    %v872 = vadd.f32 %v870, 1e-08
    %v873 = vrcp.pop %v871
    %v874 = vmul.f32 %v773, %v873
    %v875 = vrcp.pop %v872
    %v876 = vmul.f32 %v846, %v875
    %v877 = vld [vmem:[%s6] sm:$0xff]
    %879 = vrot.lane.b32.xlu0 %v478, 120
    %v880 = vpop.permute.xlu0 %879
    %882 = vxpose.xlu0.b32.start [1/16] %v880, 128
    %883 = vxpose.xlu0.b32.cont [2/16] 0.0, 128
    %884 = vxpose.xlu0.b32.cont [3/16] 0.0, 128
    %885 = vxpose.xlu0.b32.cont [4/16] 0.0, 128
    %886 = vxpose.xlu0.b32.cont [5/16] 0.0, 128
    %887 = vxpose.xlu0.b32.cont [6/16] 0.0, 128
    %888 = vxpose.xlu0.b32.cont [7/16] 0.0, 128
    %889 = vxpose.xlu0.b32.cont [8/16] 0.0, 128
    %890 = vxpose.xlu0.b32.cont [9/16] 0.0, 128
    %891 = vxpose.xlu0.b32.cont [10/16] 0.0, 128
    %892 = vxpose.xlu0.b32.cont [11/16] 0.0, 128
    %893 = vxpose.xlu0.b32.cont [12/16] 0.0, 128
    %894 = vxpose.xlu0.b32.cont [13/16] 0.0, 128
    %895 = vxpose.xlu0.b32.cont [14/16] 0.0, 128
    %896 = vxpose.xlu0.b32.cont [15/16] 0.0, 128
    %897 = vxpose.xlu0.b32.end [16/16] 0.0, 128
    %v898 = vpop.trf.xlu0
    %v899 = vpop.trf.xlu0
    %v900 = vpop.trf.xlu0
    %v901 = vpop.trf.xlu0
    %v902 = vpop.trf.xlu0
    %v903 = vpop.trf.xlu0
    %v904 = vpop.trf.xlu0
    %v905 = vpop.trf.xlu0
    %v906 = vpop.trf.xlu0
    %v907 = vpop.trf.xlu0
    %v908 = vpop.trf.xlu0
    %v909 = vpop.trf.xlu0
    %v910 = vpop.trf.xlu0
    %v911 = vpop.trf.xlu0
    %v912 = vpop.trf.xlu0
    %v913 = vpop.trf.xlu0
    %914 = vrot.lane.b32.xlu0 %v121, 56
    %v915 = vpop.permute.xlu0 %914
    %v918 = vsel %vm521, %v898, 0
    %920 = vmatprep.subr.mxu0 0.0
    %921 = vmatpush1.msra.mxu0 %v915
    %922 = vmatprep.subr.mxu0 0.0
    %923 = vmatpush1.msra.mxu0 0.0
    %924 = vmatprep.subr.mxu0 0.0
    %925 = vmatpush1.msra.mxu0 0.0
    %926 = vmatprep.subr.mxu0 0.0
    %927 = vmatpush1.msra.mxu0 0.0
    %928 = vmatprep.subr.mxu0 0.0
    %929 = vmatpush1.msra.mxu0 0.0
    %930 = vmatprep.subr.mxu0 0.0
    %931 = vmatpush1.msra.mxu0 0.0
    %932 = vmatprep.subr.mxu0 0.0
    %933 = vmatpush1.msra.mxu0 0.0
    %934 = vmatprep.subr.mxu0 0.0
    %935 = vmatpush1.msra.mxu0 0.0
    %936 = vmatprep.subr.mxu0 0.0
    %937 = vmatpush1.msra.mxu0 0.0
    %938 = vmatprep.subr.mxu0 0.0
    %939 = vmatpush1.msra.mxu0 0.0
    %940 = vmatprep.subr.mxu0 0.0
    %941 = vmatpush1.msra.mxu0 0.0
    %942 = vmatprep.subr.mxu0 0.0
    %943 = vmatpush1.msra.mxu0 0.0
    %944 = vmatprep.subr.mxu0 0.0
    %945 = vmatpush1.msra.mxu0 0.0
    %946 = vmatprep.subr.mxu0 0.0
    %947 = vmatpush1.msra.mxu0 0.0
    %948 = vmatprep.subr.mxu0 0.0
    %949 = vmatpush1.msra.mxu0 0.0
    %950 = vmatprep.subr.mxu0 0.0
    %951 = vmatpush1.msra.mxu0 0.0
    %952 = vmatprep.subr.mxu0 0.0
    %953 = vmatpush1.msra.mxu0 0.0
    %954 = vmatprep.subr.mxu0 0.0
    %955 = vmatpush1.msra.mxu0 0.0
    %956 = vmatprep.subr.mxu0 0.0
    %957 = vmatpush1.msra.mxu0 0.0
    %958 = vmatprep.subr.mxu0 0.0
    %959 = vmatpush1.msra.mxu0 0.0
    %960 = vmatprep.subr.mxu0 0.0
    %961 = vmatpush1.msra.mxu0 0.0
    %962 = vmatprep.subr.mxu0 0.0
    %963 = vmatpush1.msra.mxu0 0.0
    %964 = vmatprep.subr.mxu0 0.0
    %965 = vmatpush1.msra.mxu0 0.0
    %966 = vmatprep.subr.mxu0 0.0
    %967 = vmatpush1.msra.mxu0 0.0
    %968 = vmatprep.subr.mxu0 0.0
    %969 = vmatpush1.msra.mxu0 0.0
    %970 = vmatprep.subr.mxu0 0.0
    %971 = vmatpush1.msra.mxu0 0.0
    %972 = vmatprep.subr.mxu0 0.0
    %973 = vmatpush1.msra.mxu0 0.0
    %974 = vmatprep.subr.mxu0 0.0
    %975 = vmatpush1.msra.mxu0 0.0
    %976 = vmatprep.subr.mxu0 0.0
    %977 = vmatpush1.msra.mxu0 0.0
    %978 = vmatprep.subr.mxu0 0.0
    %979 = vmatpush1.msra.mxu0 0.0
    %980 = vmatprep.subr.mxu0 0.0
    %981 = vmatpush1.msra.mxu0 0.0
    %982 = vmatprep.subr.mxu0 0.0
    %983 = vmatpush1.msra.mxu0 0.0
    %984 = vmatprep.mubr.f32.mxu0 0.0
    %985 = vmatmul.mubr.f32.gmra.mrb[0].mxu0 %v918
    %v986 = vpop.f32.mrb[0].mxu0
    %v987 = vadd.f32 0.0, %v986
    %v988 = vpop.f32.mrb[0].mxu0
    %989 = vdwg.mxu0
    %991 = vrot.lane.b32.xlu0 %v483, 120
    %v992 = vpop.permute.xlu0 %991
    %994 = vxpose.xlu0.b32.start [1/16] %v992, 128
    %995 = vxpose.xlu0.b32.cont [2/16] 0.0, 128
    %996 = vxpose.xlu0.b32.cont [3/16] 0.0, 128
    %997 = vxpose.xlu0.b32.cont [4/16] 0.0, 128
    %998 = vxpose.xlu0.b32.cont [5/16] 0.0, 128
    %999 = vxpose.xlu0.b32.cont [6/16] 0.0, 128
    %1000 = vxpose.xlu0.b32.cont [7/16] 0.0, 128
    %1001 = vxpose.xlu0.b32.cont [8/16] 0.0, 128
    %1002 = vxpose.xlu0.b32.cont [9/16] 0.0, 128
    %1003 = vxpose.xlu0.b32.cont [10/16] 0.0, 128
    %1004 = vxpose.xlu0.b32.cont [11/16] 0.0, 128
    %1005 = vxpose.xlu0.b32.cont [12/16] 0.0, 128
    %1006 = vxpose.xlu0.b32.cont [13/16] 0.0, 128
    %1007 = vxpose.xlu0.b32.cont [14/16] 0.0, 128
    %1008 = vxpose.xlu0.b32.cont [15/16] 0.0, 128
    %1009 = vxpose.xlu0.b32.end [16/16] 0.0, 128
    %v1010 = vpop.trf.xlu0
    %v1011 = vpop.trf.xlu0
    %v1012 = vpop.trf.xlu0
    %v1013 = vpop.trf.xlu0
    %v1014 = vpop.trf.xlu0
    %v1015 = vpop.trf.xlu0
    %v1016 = vpop.trf.xlu0
    %v1017 = vpop.trf.xlu0
    %v1018 = vpop.trf.xlu0
    %v1019 = vpop.trf.xlu0
    %v1020 = vpop.trf.xlu0
    %v1021 = vpop.trf.xlu0
    %v1022 = vpop.trf.xlu0
    %v1023 = vpop.trf.xlu0
    %v1024 = vpop.trf.xlu0
    %v1025 = vpop.trf.xlu0
    %1026 = vrot.lane.b32.xlu0 %v126, 56
    %v1027 = vpop.permute.xlu0 %1026
    %v1030 = vsel %vm521, %v1010, 0
    %1032 = vmatprep.subr.mxu0 0.0
    %1033 = vmatpush1.msra.mxu0 %v1027
    %1034 = vmatprep.subr.mxu0 0.0
    %1035 = vmatpush1.msra.mxu0 0.0
    %1036 = vmatprep.subr.mxu0 0.0
    %1037 = vmatpush1.msra.mxu0 0.0
    %1038 = vmatprep.subr.mxu0 0.0
    %1039 = vmatpush1.msra.mxu0 0.0
    %1040 = vmatprep.subr.mxu0 0.0
    %1041 = vmatpush1.msra.mxu0 0.0
    %1042 = vmatprep.subr.mxu0 0.0
    %1043 = vmatpush1.msra.mxu0 0.0
    %1044 = vmatprep.subr.mxu0 0.0
    %1045 = vmatpush1.msra.mxu0 0.0
    %1046 = vmatprep.subr.mxu0 0.0
    %1047 = vmatpush1.msra.mxu0 0.0
    %1048 = vmatprep.subr.mxu0 0.0
    %1049 = vmatpush1.msra.mxu0 0.0
    %1050 = vmatprep.subr.mxu0 0.0
    %1051 = vmatpush1.msra.mxu0 0.0
    %1052 = vmatprep.subr.mxu0 0.0
    %1053 = vmatpush1.msra.mxu0 0.0
    %1054 = vmatprep.subr.mxu0 0.0
    %1055 = vmatpush1.msra.mxu0 0.0
    %1056 = vmatprep.subr.mxu0 0.0
    %1057 = vmatpush1.msra.mxu0 0.0
    %1058 = vmatprep.subr.mxu0 0.0
    %1059 = vmatpush1.msra.mxu0 0.0
    %1060 = vmatprep.subr.mxu0 0.0
    %1061 = vmatpush1.msra.mxu0 0.0
    %1062 = vmatprep.subr.mxu0 0.0
    %1063 = vmatpush1.msra.mxu0 0.0
    %1064 = vmatprep.subr.mxu0 0.0
    %1065 = vmatpush1.msra.mxu0 0.0
    %1066 = vmatprep.subr.mxu0 0.0
    %1067 = vmatpush1.msra.mxu0 0.0
    %1068 = vmatprep.subr.mxu0 0.0
    %1069 = vmatpush1.msra.mxu0 0.0
    %1070 = vmatprep.subr.mxu0 0.0
    %1071 = vmatpush1.msra.mxu0 0.0
    %1072 = vmatprep.subr.mxu0 0.0
    %1073 = vmatpush1.msra.mxu0 0.0
    %1074 = vmatprep.subr.mxu0 0.0
    %1075 = vmatpush1.msra.mxu0 0.0
    %1076 = vmatprep.subr.mxu0 0.0
    %1077 = vmatpush1.msra.mxu0 0.0
    %1078 = vmatprep.subr.mxu0 0.0
    %1079 = vmatpush1.msra.mxu0 0.0
    %1080 = vmatprep.subr.mxu0 0.0
    %1081 = vmatpush1.msra.mxu0 0.0
    %1082 = vmatprep.subr.mxu0 0.0
    %1083 = vmatpush1.msra.mxu0 0.0
    %1084 = vmatprep.subr.mxu0 0.0
    %1085 = vmatpush1.msra.mxu0 0.0
    %1086 = vmatprep.subr.mxu0 0.0
    %1087 = vmatpush1.msra.mxu0 0.0
    %1088 = vmatprep.subr.mxu0 0.0
    %1089 = vmatpush1.msra.mxu0 0.0
    %1090 = vmatprep.subr.mxu0 0.0
    %1091 = vmatpush1.msra.mxu0 0.0
    %1092 = vmatprep.subr.mxu0 0.0
    %1093 = vmatpush1.msra.mxu0 0.0
    %1094 = vmatprep.subr.mxu0 0.0
    %1095 = vmatpush1.msra.mxu0 0.0
    %1096 = vmatprep.mubr.f32.mxu0 0.0
    %1097 = vmatmul.mubr.f32.gmra.mrb[0].mxu0 %v1030
    %v1098 = vpop.f32.mrb[0].mxu0
    %v1099 = vadd.f32 0.0, %v1098
    %v1100 = vpop.f32.mrb[0].mxu0
    %1101 = vdwg.mxu0
    %1102 = vrot.lane.b32.xlu0 %v312, 120
    %v1103 = vpop.permute.xlu0 %1102
    %v1104 = vsel %vm521, %v1103, 0
    %1106 = vmatprep.subr.mxu0 0.0
    %1107 = vmatpush1.msra.mxu0 %v987
    %1108 = vmatprep.subr.mxu0 0.0
    %1109 = vmatpush1.msra.mxu0 0.0
    %1110 = vmatprep.subr.mxu0 0.0
    %1111 = vmatpush1.msra.mxu0 0.0
    %1112 = vmatprep.subr.mxu0 0.0
    %1113 = vmatpush1.msra.mxu0 0.0
    %1114 = vmatprep.subr.mxu0 0.0
    %1115 = vmatpush1.msra.mxu0 0.0
    %1116 = vmatprep.subr.mxu0 0.0
    %1117 = vmatpush1.msra.mxu0 0.0
    %1118 = vmatprep.subr.mxu0 0.0
    %1119 = vmatpush1.msra.mxu0 0.0
    %1120 = vmatprep.subr.mxu0 0.0
    %1121 = vmatpush1.msra.mxu0 0.0
    %1122 = vmatprep.subr.mxu0 0.0
    %1123 = vmatpush1.msra.mxu0 0.0
    %1124 = vmatprep.subr.mxu0 0.0
    %1125 = vmatpush1.msra.mxu0 0.0
    %1126 = vmatprep.subr.mxu0 0.0
    %1127 = vmatpush1.msra.mxu0 0.0
    %1128 = vmatprep.subr.mxu0 0.0
    %1129 = vmatpush1.msra.mxu0 0.0
    %1130 = vmatprep.subr.mxu0 0.0
    %1131 = vmatpush1.msra.mxu0 0.0
    %1132 = vmatprep.subr.mxu0 0.0
    %1133 = vmatpush1.msra.mxu0 0.0
    %1134 = vmatprep.subr.mxu0 0.0
    %1135 = vmatpush1.msra.mxu0 0.0
    %1136 = vmatprep.subr.mxu0 0.0
    %1137 = vmatpush1.msra.mxu0 0.0
    %1138 = vmatprep.subr.mxu0 0.0
    %1139 = vmatpush1.msra.mxu0 0.0
    %1140 = vmatprep.subr.mxu0 0.0
    %1141 = vmatpush1.msra.mxu0 0.0
    %1142 = vmatprep.subr.mxu0 0.0
    %1143 = vmatpush1.msra.mxu0 0.0
    %1144 = vmatprep.subr.mxu0 0.0
    %1145 = vmatpush1.msra.mxu0 0.0
    %1146 = vmatprep.subr.mxu0 0.0
    %1147 = vmatpush1.msra.mxu0 0.0
    %1148 = vmatprep.subr.mxu0 0.0
    %1149 = vmatpush1.msra.mxu0 0.0
    %1150 = vmatprep.subr.mxu0 0.0
    %1151 = vmatpush1.msra.mxu0 0.0
    %1152 = vmatprep.subr.mxu0 0.0
    %1153 = vmatpush1.msra.mxu0 0.0
    %1154 = vmatprep.subr.mxu0 0.0
    %1155 = vmatpush1.msra.mxu0 0.0
    %1156 = vmatprep.subr.mxu0 0.0
    %1157 = vmatpush1.msra.mxu0 0.0
    %1158 = vmatprep.subr.mxu0 0.0
    %1159 = vmatpush1.msra.mxu0 0.0
    %1160 = vmatprep.subr.mxu0 0.0
    %1161 = vmatpush1.msra.mxu0 0.0
    %1162 = vmatprep.subr.mxu0 0.0
    %1163 = vmatpush1.msra.mxu0 0.0
    %1164 = vmatprep.subr.mxu0 0.0
    %1165 = vmatpush1.msra.mxu0 0.0
    %1166 = vmatprep.subr.mxu0 0.0
    %1167 = vmatpush1.msra.mxu0 0.0
    %1168 = vmatprep.subr.mxu0 0.0
    %1169 = vmatpush1.msra.mxu0 0.0
    %1170 = vmatprep.mubr.f32.mxu0 0.0
    %1171 = vmatmul.mubr.f32.gmra.mrb[0].mxu0 %v1104
    %v1172 = vpop.f32.mrb[0].mxu0
    %v1173 = vadd.f32 0.0, %v1172
    %v1174 = vpop.f32.mrb[0].mxu0
    %1175 = vdwg.mxu0
    %1176 = vrot.lane.b32.xlu0 %v317, 120
    %v1177 = vpop.permute.xlu0 %1176
    %v1178 = vsel %vm521, %v1177, 0
    %1180 = vmatprep.subr.mxu0 0.0
    %1181 = vmatpush1.msra.mxu0 %v1099
    %1182 = vmatprep.subr.mxu0 0.0
    %1183 = vmatpush1.msra.mxu0 0.0
    %1184 = vmatprep.subr.mxu0 0.0
    %1185 = vmatpush1.msra.mxu0 0.0
    %1186 = vmatprep.subr.mxu0 0.0
    %1187 = vmatpush1.msra.mxu0 0.0
    %1188 = vmatprep.subr.mxu0 0.0
    %1189 = vmatpush1.msra.mxu0 0.0
    %1190 = vmatprep.subr.mxu0 0.0
    %1191 = vmatpush1.msra.mxu0 0.0
    %1192 = vmatprep.subr.mxu0 0.0
    %1193 = vmatpush1.msra.mxu0 0.0
    %1194 = vmatprep.subr.mxu0 0.0
    %1195 = vmatpush1.msra.mxu0 0.0
    %1196 = vmatprep.subr.mxu0 0.0
    %1197 = vmatpush1.msra.mxu0 0.0
    %1198 = vmatprep.subr.mxu0 0.0
    %1199 = vmatpush1.msra.mxu0 0.0
    %1200 = vmatprep.subr.mxu0 0.0
    %1201 = vmatpush1.msra.mxu0 0.0
    %1202 = vmatprep.subr.mxu0 0.0
    %1203 = vmatpush1.msra.mxu0 0.0
    %1204 = vmatprep.subr.mxu0 0.0
    %1205 = vmatpush1.msra.mxu0 0.0
    %1206 = vmatprep.subr.mxu0 0.0
    %1207 = vmatpush1.msra.mxu0 0.0
    %1208 = vmatprep.subr.mxu0 0.0
    %1209 = vmatpush1.msra.mxu0 0.0
    %1210 = vmatprep.subr.mxu0 0.0
    %1211 = vmatpush1.msra.mxu0 0.0
    %1212 = vmatprep.subr.mxu0 0.0
    %1213 = vmatpush1.msra.mxu0 0.0
    %1214 = vmatprep.subr.mxu0 0.0
    %1215 = vmatpush1.msra.mxu0 0.0
    %1216 = vmatprep.subr.mxu0 0.0
    %1217 = vmatpush1.msra.mxu0 0.0
    %1218 = vmatprep.subr.mxu0 0.0
    %1219 = vmatpush1.msra.mxu0 0.0
    %1220 = vmatprep.subr.mxu0 0.0
    %1221 = vmatpush1.msra.mxu0 0.0
    %1222 = vmatprep.subr.mxu0 0.0
    %1223 = vmatpush1.msra.mxu0 0.0
    %1224 = vmatprep.subr.mxu0 0.0
    %1225 = vmatpush1.msra.mxu0 0.0
    %1226 = vmatprep.subr.mxu0 0.0
    %1227 = vmatpush1.msra.mxu0 0.0
    %1228 = vmatprep.subr.mxu0 0.0
    %1229 = vmatpush1.msra.mxu0 0.0
    %1230 = vmatprep.subr.mxu0 0.0
    %1231 = vmatpush1.msra.mxu0 0.0
    %1232 = vmatprep.subr.mxu0 0.0
    %1233 = vmatpush1.msra.mxu0 0.0
    %1234 = vmatprep.subr.mxu0 0.0
    %1235 = vmatpush1.msra.mxu0 0.0
    %1236 = vmatprep.subr.mxu0 0.0
    %1237 = vmatpush1.msra.mxu0 0.0
    %1238 = vmatprep.subr.mxu0 0.0
    %1239 = vmatpush1.msra.mxu0 0.0
    %1240 = vmatprep.subr.mxu0 0.0
    %1241 = vmatpush1.msra.mxu0 0.0
    %1242 = vmatprep.subr.mxu0 0.0
    %1243 = vmatpush1.msra.mxu0 0.0
    %1244 = vmatprep.mubr.f32.mxu0 0.0
    %1245 = vmatmul.mubr.f32.gmra.mrb[0].mxu0 %v1178
    %v1246 = vpop.f32.mrb[0].mxu0
    %v1247 = vadd.f32 0.0, %v1246
    %v1248 = vpop.f32.mrb[0].mxu0
    %1249 = vdwg.mxu0
    %vm1250 = vcmask 130112
    %v1251 = vsel %vm1250, %v478, 0.0
    %v1252 = vrot.slane %v1251, 4
    %v1253 = vadd.f32 %v1251, %v1252
    %v1254 = vrot.slane %v1253, 2
    %v1255 = vadd.f32 %v1253, %v1254
    %v1256 = vrot.slane %v1255, 1
    %v1257 = vadd.f32 %v1255, %v1256
    %v1258 = vsel %vm1250, %v483, 0.0
    %v1259 = vrot.slane %v1258, 4
    %v1260 = vadd.f32 %v1258, %v1259
    %v1261 = vrot.slane %v1260, 2
    %v1262 = vadd.f32 %v1260, %v1261
    %v1263 = vrot.slane %v1262, 1
    %v1264 = vadd.f32 %v1262, %v1263
    %v1265 = vmul.f32 %v312, %v1257
    %v1266 = vmul.f32 %v317, %v1264
    %1269 = vrot.lane.b32.xlu0 %v1265, 120
    %v1270 = vpop.permute.xlu0 %1269
    %1271 = vrot.lane.b32.xlu0 %v1266, 120
    %v1272 = vpop.permute.xlu0 %1271
    %v1275 = vsel %vm521, %v1270, 0.0
    %1276 = vadd.xlane.f32.xlu0 %v1275
    %v1277 = vpop.xlane.xlu0 %1276
    %v1278 = vsel %vm521, %v1272, 0.0
    %1279 = vadd.xlane.f32.xlu0 %v1278
    %v1280 = vpop.xlane.xlu0 %1279
    %v1281 = vadd.f32 %v1277, 1e-08
    %v1282 = vadd.f32 %v1280, 1e-08
    %v1283 = vrcp.pop %v1281
    %v1284 = vmul.f32 %v1173, %v1283
    %v1285 = vrcp.pop %v1282
    %v1286 = vmul.f32 %v1247, %v1285
    %v1287 = vld [vmem:[%s6 + $0x8] sm:$0xff]
    %v1289 = vsel %vm521, %v1284, 0
    %v1292 = vsel %vm521, %v1286, 0
    %1294 = vmatprep.subr.mxu0 0.0
    %1295 = vmatpush1.msra.mxu0 %v1287
    %1296 = vmatprep.subr.mxu0 0.0
    %1297 = vmatpush1.msra.mxu0 0.0
    %1298 = vmatprep.subr.mxu0 0.0
    %1299 = vmatpush1.msra.mxu0 0.0
    %1300 = vmatprep.subr.mxu0 0.0
    %1301 = vmatpush1.msra.mxu0 0.0
    %1302 = vmatprep.subr.mxu0 0.0
    %1303 = vmatpush1.msra.mxu0 0.0
    %1304 = vmatprep.subr.mxu0 0.0
    %1305 = vmatpush1.msra.mxu0 0.0
    %1306 = vmatprep.subr.mxu0 0.0
    %1307 = vmatpush1.msra.mxu0 0.0
    %1308 = vmatprep.subr.mxu0 0.0
    %1309 = vmatpush1.msra.mxu0 0.0
    %1310 = vmatprep.subr.mxu0 0.0
    %1311 = vmatpush1.msra.mxu0 0.0
    %1312 = vmatprep.subr.mxu0 0.0
    %1313 = vmatpush1.msra.mxu0 0.0
    %1314 = vmatprep.subr.mxu0 0.0
    %1315 = vmatpush1.msra.mxu0 0.0
    %1316 = vmatprep.subr.mxu0 0.0
    %1317 = vmatpush1.msra.mxu0 0.0
    %1318 = vmatprep.subr.mxu0 0.0
    %1319 = vmatpush1.msra.mxu0 0.0
    %1320 = vmatprep.subr.mxu0 0.0
    %1321 = vmatpush1.msra.mxu0 0.0
    %1322 = vmatprep.subr.mxu0 0.0
    %1323 = vmatpush1.msra.mxu0 0.0
    %1324 = vmatprep.subr.mxu0 0.0
    %1325 = vmatpush1.msra.mxu0 0.0
    %1326 = vmatprep.subr.mxu0 0.0
    %1327 = vmatpush1.msra.mxu0 0.0
    %1328 = vmatprep.subr.mxu0 0.0
    %1329 = vmatpush1.msra.mxu0 0.0
    %1330 = vmatprep.subr.mxu0 0.0
    %1331 = vmatpush1.msra.mxu0 0.0
    %1332 = vmatprep.subr.mxu0 0.0
    %1333 = vmatpush1.msra.mxu0 0.0
    %1334 = vmatprep.subr.mxu0 0.0
    %1335 = vmatpush1.msra.mxu0 0.0
    %1336 = vmatprep.subr.mxu0 0.0
    %1337 = vmatpush1.msra.mxu0 0.0
    %1338 = vmatprep.subr.mxu0 0.0
    %1339 = vmatpush1.msra.mxu0 0.0
    %1340 = vmatprep.subr.mxu0 0.0
    %1341 = vmatpush1.msra.mxu0 0.0
    %1342 = vmatprep.subr.mxu0 0.0
    %1343 = vmatpush1.msra.mxu0 0.0
    %1344 = vmatprep.subr.mxu0 0.0
    %1345 = vmatpush1.msra.mxu0 0.0
    %1346 = vmatprep.subr.mxu0 0.0
    %1347 = vmatpush1.msra.mxu0 0.0
    %1348 = vmatprep.subr.mxu0 0.0
    %1349 = vmatpush1.msra.mxu0 0.0
    %1350 = vmatprep.subr.mxu0 0.0
    %1351 = vmatpush1.msra.mxu0 0.0
    %1352 = vmatprep.subr.mxu0 0.0
    %1353 = vmatpush1.msra.mxu0 0.0
    %1354 = vmatprep.subr.mxu0 0.0
    %1355 = vmatpush1.msra.mxu0 0.0
    %1356 = vmatprep.subr.mxu0 0.0
    %1357 = vmatpush1.msra.mxu0 0.0
    %1358 = vmatprep.mubr.f32.mxu0 0.0
    %1359 = vmatmul.mubr.f32.gmra.mrb[0].mxu0 %v1289
    %v1360 = vpop.f32.mrb[0].mxu0
    %v1361 = vadd.f32 0.0, %v1360
    %v1362 = vpop.f32.mrb[0].mxu0
    %1363 = vmatprep.mubr.f32.mxu0 0.0
    %1364 = vmatmul.mubr.f32.gmra.mrb[0].mxu0 %v1292
    %v1365 = vpop.f32.mrb[0].mxu0
    %v1366 = vadd.f32 0.0, %v1365
    %v1367 = vpop.f32.mrb[0].mxu0
    %1368 = vdwg.mxu0
    %v1370 = vsel %vm521, %v874, 0
    %v1373 = vsel %vm521, %v876, 0
    %1375 = vmatprep.subr.mxu0 0.0
    %1376 = vmatpush1.msra.mxu0 %v877
    %1377 = vmatprep.subr.mxu0 0.0
    %1378 = vmatpush1.msra.mxu0 0.0
    %1379 = vmatprep.subr.mxu0 0.0
    %1380 = vmatpush1.msra.mxu0 0.0
    %1381 = vmatprep.subr.mxu0 0.0
    %1382 = vmatpush1.msra.mxu0 0.0
    %1383 = vmatprep.subr.mxu0 0.0
    %1384 = vmatpush1.msra.mxu0 0.0
    %1385 = vmatprep.subr.mxu0 0.0
    %1386 = vmatpush1.msra.mxu0 0.0
    %1387 = vmatprep.subr.mxu0 0.0
    %1388 = vmatpush1.msra.mxu0 0.0
    %1389 = vmatprep.subr.mxu0 0.0
    %1390 = vmatpush1.msra.mxu0 0.0
    %1391 = vmatprep.subr.mxu0 0.0
    %1392 = vmatpush1.msra.mxu0 0.0
    %1393 = vmatprep.subr.mxu0 0.0
    %1394 = vmatpush1.msra.mxu0 0.0
    %1395 = vmatprep.subr.mxu0 0.0
    %1396 = vmatpush1.msra.mxu0 0.0
    %1397 = vmatprep.subr.mxu0 0.0
    %1398 = vmatpush1.msra.mxu0 0.0
    %1399 = vmatprep.subr.mxu0 0.0
    %1400 = vmatpush1.msra.mxu0 0.0
    %1401 = vmatprep.subr.mxu0 0.0
    %1402 = vmatpush1.msra.mxu0 0.0
    %1403 = vmatprep.subr.mxu0 0.0
    %1404 = vmatpush1.msra.mxu0 0.0
    %1405 = vmatprep.subr.mxu0 0.0
    %1406 = vmatpush1.msra.mxu0 0.0
    %1407 = vmatprep.subr.mxu0 0.0
    %1408 = vmatpush1.msra.mxu0 0.0
    %1409 = vmatprep.subr.mxu0 0.0
    %1410 = vmatpush1.msra.mxu0 0.0
    %1411 = vmatprep.subr.mxu0 0.0
    %1412 = vmatpush1.msra.mxu0 0.0
    %1413 = vmatprep.subr.mxu0 0.0
    %1414 = vmatpush1.msra.mxu0 0.0
    %1415 = vmatprep.subr.mxu0 0.0
    %1416 = vmatpush1.msra.mxu0 0.0
    %1417 = vmatprep.subr.mxu0 0.0
    %1418 = vmatpush1.msra.mxu0 0.0
    %1419 = vmatprep.subr.mxu0 0.0
    %1420 = vmatpush1.msra.mxu0 0.0
    %1421 = vmatprep.subr.mxu0 0.0
    %1422 = vmatpush1.msra.mxu0 0.0
    %1423 = vmatprep.subr.mxu0 0.0
    %1424 = vmatpush1.msra.mxu0 0.0
    %1425 = vmatprep.subr.mxu0 0.0
    %1426 = vmatpush1.msra.mxu0 0.0
    %1427 = vmatprep.subr.mxu0 0.0
    %1428 = vmatpush1.msra.mxu0 0.0
    %1429 = vmatprep.subr.mxu0 0.0
    %1430 = vmatpush1.msra.mxu0 0.0
    %1431 = vmatprep.subr.mxu0 0.0
    %1432 = vmatpush1.msra.mxu0 0.0
    %1433 = vmatprep.subr.mxu0 0.0
    %1434 = vmatpush1.msra.mxu0 0.0
    %1435 = vmatprep.subr.mxu0 0.0
    %1436 = vmatpush1.msra.mxu0 0.0
    %1437 = vmatprep.subr.mxu0 0.0
    %1438 = vmatpush1.msra.mxu0 0.0
    %1439 = vmatprep.mubr.f32.mxu0 0.0
    %1440 = vmatmul.mubr.f32.gmra.mrb[0].mxu0 %v1370
    %v1441 = vpop.f32.mrb[0].mxu0
    %v1442 = vadd.f32 %v1361, %v1441
    %v1443 = vpop.f32.mrb[0].mxu0
    %1444 = vmatprep.mubr.f32.mxu0 0.0
    %1445 = vmatmul.mubr.f32.gmra.mrb[0].mxu0 %v1373
    %v1446 = vpop.f32.mrb[0].mxu0
    %v1447 = vadd.f32 %v1366, %v1446
    %v1448 = vpop.f32.mrb[0].mxu0
    %1449 = vdwg.mxu0
    %1450 = vrot.lane.b32.xlu0 %v478, 112
    %v1451 = vpop.permute.xlu0 %1450
    %1453 = vxpose.xlu0.b32.start [1/16] %v1451, 128
    %1454 = vxpose.xlu0.b32.cont [2/16] 0.0, 128
    %1455 = vxpose.xlu0.b32.cont [3/16] 0.0, 128
    %1456 = vxpose.xlu0.b32.cont [4/16] 0.0, 128
    %1457 = vxpose.xlu0.b32.cont [5/16] 0.0, 128
    %1458 = vxpose.xlu0.b32.cont [6/16] 0.0, 128
    %1459 = vxpose.xlu0.b32.cont [7/16] 0.0, 128
    %1460 = vxpose.xlu0.b32.cont [8/16] 0.0, 128
    %1461 = vxpose.xlu0.b32.cont [9/16] 0.0, 128
    %1462 = vxpose.xlu0.b32.cont [10/16] 0.0, 128
    %1463 = vxpose.xlu0.b32.cont [11/16] 0.0, 128
    %1464 = vxpose.xlu0.b32.cont [12/16] 0.0, 128
    %1465 = vxpose.xlu0.b32.cont [13/16] 0.0, 128
    %1466 = vxpose.xlu0.b32.cont [14/16] 0.0, 128
    %1467 = vxpose.xlu0.b32.cont [15/16] 0.0, 128
    %1468 = vxpose.xlu0.b32.end [16/16] 0.0, 128
    %v1469 = vpop.trf.xlu0
    %v1470 = vpop.trf.xlu0
    %v1471 = vpop.trf.xlu0
    %v1472 = vpop.trf.xlu0
    %v1473 = vpop.trf.xlu0
    %v1474 = vpop.trf.xlu0
    %v1475 = vpop.trf.xlu0
    %v1476 = vpop.trf.xlu0
    %v1477 = vpop.trf.xlu0
    %v1478 = vpop.trf.xlu0
    %v1479 = vpop.trf.xlu0
    %v1480 = vpop.trf.xlu0
    %v1481 = vpop.trf.xlu0
    %v1482 = vpop.trf.xlu0
    %v1483 = vpop.trf.xlu0
    %v1484 = vpop.trf.xlu0
    %1485 = vrot.lane.b32.xlu0 %v121, 48
    %v1486 = vpop.permute.xlu0 %1485
    %v1489 = vsel %vm521, %v1469, 0
    %1491 = vmatprep.subr.mxu0 0.0
    %1492 = vmatpush1.msra.mxu0 %v1486
    %1493 = vmatprep.subr.mxu0 0.0
    %1494 = vmatpush1.msra.mxu0 0.0
    %1495 = vmatprep.subr.mxu0 0.0
    %1496 = vmatpush1.msra.mxu0 0.0
    %1497 = vmatprep.subr.mxu0 0.0
    %1498 = vmatpush1.msra.mxu0 0.0
    %1499 = vmatprep.subr.mxu0 0.0
    %1500 = vmatpush1.msra.mxu0 0.0
    %1501 = vmatprep.subr.mxu0 0.0
    %1502 = vmatpush1.msra.mxu0 0.0
    %1503 = vmatprep.subr.mxu0 0.0
    %1504 = vmatpush1.msra.mxu0 0.0
    %1505 = vmatprep.subr.mxu0 0.0
    %1506 = vmatpush1.msra.mxu0 0.0
    %1507 = vmatprep.subr.mxu0 0.0
    %1508 = vmatpush1.msra.mxu0 0.0
    %1509 = vmatprep.subr.mxu0 0.0
    %1510 = vmatpush1.msra.mxu0 0.0
    %1511 = vmatprep.subr.mxu0 0.0
    %1512 = vmatpush1.msra.mxu0 0.0
    %1513 = vmatprep.subr.mxu0 0.0
    %1514 = vmatpush1.msra.mxu0 0.0
    %1515 = vmatprep.subr.mxu0 0.0
    %1516 = vmatpush1.msra.mxu0 0.0
    %1517 = vmatprep.subr.mxu0 0.0
    %1518 = vmatpush1.msra.mxu0 0.0
    %1519 = vmatprep.subr.mxu0 0.0
    %1520 = vmatpush1.msra.mxu0 0.0
    %1521 = vmatprep.subr.mxu0 0.0
    %1522 = vmatpush1.msra.mxu0 0.0
    %1523 = vmatprep.subr.mxu0 0.0
    %1524 = vmatpush1.msra.mxu0 0.0
    %1525 = vmatprep.subr.mxu0 0.0
    %1526 = vmatpush1.msra.mxu0 0.0
    %1527 = vmatprep.subr.mxu0 0.0
    %1528 = vmatpush1.msra.mxu0 0.0
    %1529 = vmatprep.subr.mxu0 0.0
    %1530 = vmatpush1.msra.mxu0 0.0
    %1531 = vmatprep.subr.mxu0 0.0
    %1532 = vmatpush1.msra.mxu0 0.0
    %1533 = vmatprep.subr.mxu0 0.0
    %1534 = vmatpush1.msra.mxu0 0.0
    %1535 = vmatprep.subr.mxu0 0.0
    %1536 = vmatpush1.msra.mxu0 0.0
    %1537 = vmatprep.subr.mxu0 0.0
    %1538 = vmatpush1.msra.mxu0 0.0
    %1539 = vmatprep.subr.mxu0 0.0
    %1540 = vmatpush1.msra.mxu0 0.0
    %1541 = vmatprep.subr.mxu0 0.0
    %1542 = vmatpush1.msra.mxu0 0.0
    %1543 = vmatprep.subr.mxu0 0.0
    %1544 = vmatpush1.msra.mxu0 0.0
    %1545 = vmatprep.subr.mxu0 0.0
    %1546 = vmatpush1.msra.mxu0 0.0
    %1547 = vmatprep.subr.mxu0 0.0
    %1548 = vmatpush1.msra.mxu0 0.0
    %1549 = vmatprep.subr.mxu0 0.0
    %1550 = vmatpush1.msra.mxu0 0.0
    %1551 = vmatprep.subr.mxu0 0.0
    %1552 = vmatpush1.msra.mxu0 0.0
    %1553 = vmatprep.subr.mxu0 0.0
    %1554 = vmatpush1.msra.mxu0 0.0
    %1555 = vmatprep.mubr.f32.mxu0 0.0
    %1556 = vmatmul.mubr.f32.gmra.mrb[0].mxu0 %v1489
    %v1557 = vpop.f32.mrb[0].mxu0
    %v1558 = vadd.f32 0.0, %v1557
    %v1559 = vpop.f32.mrb[0].mxu0
    %1560 = vdwg.mxu0
    %1561 = vrot.lane.b32.xlu0 %v483, 112
    %v1562 = vpop.permute.xlu0 %1561
    %1564 = vxpose.xlu0.b32.start [1/16] %v1562, 128
    %1565 = vxpose.xlu0.b32.cont [2/16] 0.0, 128
    %1566 = vxpose.xlu0.b32.cont [3/16] 0.0, 128
    %1567 = vxpose.xlu0.b32.cont [4/16] 0.0, 128
    %1568 = vxpose.xlu0.b32.cont [5/16] 0.0, 128
    %1569 = vxpose.xlu0.b32.cont [6/16] 0.0, 128
    %1570 = vxpose.xlu0.b32.cont [7/16] 0.0, 128
    %1571 = vxpose.xlu0.b32.cont [8/16] 0.0, 128
    %1572 = vxpose.xlu0.b32.cont [9/16] 0.0, 128
    %1573 = vxpose.xlu0.b32.cont [10/16] 0.0, 128
    %1574 = vxpose.xlu0.b32.cont [11/16] 0.0, 128
    %1575 = vxpose.xlu0.b32.cont [12/16] 0.0, 128
    %1576 = vxpose.xlu0.b32.cont [13/16] 0.0, 128
    %1577 = vxpose.xlu0.b32.cont [14/16] 0.0, 128
    %1578 = vxpose.xlu0.b32.cont [15/16] 0.0, 128
    %1579 = vxpose.xlu0.b32.end [16/16] 0.0, 128
    %v1580 = vpop.trf.xlu0
    %v1581 = vpop.trf.xlu0
    %v1582 = vpop.trf.xlu0
    %v1583 = vpop.trf.xlu0
    %v1584 = vpop.trf.xlu0
    %v1585 = vpop.trf.xlu0
    %v1586 = vpop.trf.xlu0
    %v1587 = vpop.trf.xlu0
    %v1588 = vpop.trf.xlu0
    %v1589 = vpop.trf.xlu0
    %v1590 = vpop.trf.xlu0
    %v1591 = vpop.trf.xlu0
    %v1592 = vpop.trf.xlu0
    %v1593 = vpop.trf.xlu0
    %v1594 = vpop.trf.xlu0
    %v1595 = vpop.trf.xlu0
    %1596 = vrot.lane.b32.xlu0 %v126, 48
    %v1597 = vpop.permute.xlu0 %1596
    %v1600 = vsel %vm521, %v1580, 0
    %1602 = vmatprep.subr.mxu0 0.0
    %1603 = vmatpush1.msra.mxu0 %v1597
    %1604 = vmatprep.subr.mxu0 0.0
    %1605 = vmatpush1.msra.mxu0 0.0
    %1606 = vmatprep.subr.mxu0 0.0
    %1607 = vmatpush1.msra.mxu0 0.0
    %1608 = vmatprep.subr.mxu0 0.0
    %1609 = vmatpush1.msra.mxu0 0.0
    %1610 = vmatprep.subr.mxu0 0.0
    %1611 = vmatpush1.msra.mxu0 0.0
    %1612 = vmatprep.subr.mxu0 0.0
    %1613 = vmatpush1.msra.mxu0 0.0
    %1614 = vmatprep.subr.mxu0 0.0
    %1615 = vmatpush1.msra.mxu0 0.0
    %1616 = vmatprep.subr.mxu0 0.0
    %1617 = vmatpush1.msra.mxu0 0.0
    %1618 = vmatprep.subr.mxu0 0.0
    %1619 = vmatpush1.msra.mxu0 0.0
    %1620 = vmatprep.subr.mxu0 0.0
    %1621 = vmatpush1.msra.mxu0 0.0
    %1622 = vmatprep.subr.mxu0 0.0
    %1623 = vmatpush1.msra.mxu0 0.0
    %1624 = vmatprep.subr.mxu0 0.0
    %1625 = vmatpush1.msra.mxu0 0.0
    %1626 = vmatprep.subr.mxu0 0.0
    %1627 = vmatpush1.msra.mxu0 0.0
    %1628 = vmatprep.subr.mxu0 0.0
    %1629 = vmatpush1.msra.mxu0 0.0
    %1630 = vmatprep.subr.mxu0 0.0
    %1631 = vmatpush1.msra.mxu0 0.0
    %1632 = vmatprep.subr.mxu0 0.0
    %1633 = vmatpush1.msra.mxu0 0.0
    %1634 = vmatprep.subr.mxu0 0.0
    %1635 = vmatpush1.msra.mxu0 0.0
    %1636 = vmatprep.subr.mxu0 0.0
    %1637 = vmatpush1.msra.mxu0 0.0
    %1638 = vmatprep.subr.mxu0 0.0
    %1639 = vmatpush1.msra.mxu0 0.0
    %1640 = vmatprep.subr.mxu0 0.0
    %1641 = vmatpush1.msra.mxu0 0.0
    %1642 = vmatprep.subr.mxu0 0.0
    %1643 = vmatpush1.msra.mxu0 0.0
    %1644 = vmatprep.subr.mxu0 0.0
    %1645 = vmatpush1.msra.mxu0 0.0
    %1646 = vmatprep.subr.mxu0 0.0
    %1647 = vmatpush1.msra.mxu0 0.0
    %1648 = vmatprep.subr.mxu0 0.0
    %1649 = vmatpush1.msra.mxu0 0.0
    %1650 = vmatprep.subr.mxu0 0.0
    %1651 = vmatpush1.msra.mxu0 0.0
    %1652 = vmatprep.subr.mxu0 0.0
    %1653 = vmatpush1.msra.mxu0 0.0
    %1654 = vmatprep.subr.mxu0 0.0
    %1655 = vmatpush1.msra.mxu0 0.0
    %1656 = vmatprep.subr.mxu0 0.0
    %1657 = vmatpush1.msra.mxu0 0.0
    %1658 = vmatprep.subr.mxu0 0.0
    %1659 = vmatpush1.msra.mxu0 0.0
    %1660 = vmatprep.subr.mxu0 0.0
    %1661 = vmatpush1.msra.mxu0 0.0
    %1662 = vmatprep.subr.mxu0 0.0
    %1663 = vmatpush1.msra.mxu0 0.0
    %1664 = vmatprep.subr.mxu0 0.0
    %1665 = vmatpush1.msra.mxu0 0.0
    %1666 = vmatprep.mubr.f32.mxu0 0.0
    %1667 = vmatmul.mubr.f32.gmra.mrb[0].mxu0 %v1600
    %v1668 = vpop.f32.mrb[0].mxu0
    %v1669 = vadd.f32 0.0, %v1668
    %v1670 = vpop.f32.mrb[0].mxu0
    %1671 = vdwg.mxu0
    %1672 = vrot.lane.b32.xlu0 %v312, 112
    %v1673 = vpop.permute.xlu0 %1672
    %v1674 = vsel %vm521, %v1673, 0
    %1676 = vmatprep.subr.mxu0 0.0
    %1677 = vmatpush1.msra.mxu0 %v1558
    %1678 = vmatprep.subr.mxu0 0.0
    %1679 = vmatpush1.msra.mxu0 0.0
    %1680 = vmatprep.subr.mxu0 0.0
    %1681 = vmatpush1.msra.mxu0 0.0
    %1682 = vmatprep.subr.mxu0 0.0
    %1683 = vmatpush1.msra.mxu0 0.0
    %1684 = vmatprep.subr.mxu0 0.0
    %1685 = vmatpush1.msra.mxu0 0.0
    %1686 = vmatprep.subr.mxu0 0.0
    %1687 = vmatpush1.msra.mxu0 0.0
    %1688 = vmatprep.subr.mxu0 0.0
    %1689 = vmatpush1.msra.mxu0 0.0
    %1690 = vmatprep.subr.mxu0 0.0
    %1691 = vmatpush1.msra.mxu0 0.0
    %1692 = vmatprep.subr.mxu0 0.0
    %1693 = vmatpush1.msra.mxu0 0.0
    %1694 = vmatprep.subr.mxu0 0.0
    %1695 = vmatpush1.msra.mxu0 0.0
    %1696 = vmatprep.subr.mxu0 0.0
    %1697 = vmatpush1.msra.mxu0 0.0
    %1698 = vmatprep.subr.mxu0 0.0
    %1699 = vmatpush1.msra.mxu0 0.0
    %1700 = vmatprep.subr.mxu0 0.0
    %1701 = vmatpush1.msra.mxu0 0.0
    %1702 = vmatprep.subr.mxu0 0.0
    %1703 = vmatpush1.msra.mxu0 0.0
    %1704 = vmatprep.subr.mxu0 0.0
    %1705 = vmatpush1.msra.mxu0 0.0
    %1706 = vmatprep.subr.mxu0 0.0
    %1707 = vmatpush1.msra.mxu0 0.0
    %1708 = vmatprep.subr.mxu0 0.0
    %1709 = vmatpush1.msra.mxu0 0.0
    %1710 = vmatprep.subr.mxu0 0.0
    %1711 = vmatpush1.msra.mxu0 0.0
    %1712 = vmatprep.subr.mxu0 0.0
    %1713 = vmatpush1.msra.mxu0 0.0
    %1714 = vmatprep.subr.mxu0 0.0
    %1715 = vmatpush1.msra.mxu0 0.0
    %1716 = vmatprep.subr.mxu0 0.0
    %1717 = vmatpush1.msra.mxu0 0.0
    %1718 = vmatprep.subr.mxu0 0.0
    %1719 = vmatpush1.msra.mxu0 0.0
    %1720 = vmatprep.subr.mxu0 0.0
    %1721 = vmatpush1.msra.mxu0 0.0
    %1722 = vmatprep.subr.mxu0 0.0
    %1723 = vmatpush1.msra.mxu0 0.0
    %1724 = vmatprep.subr.mxu0 0.0
    %1725 = vmatpush1.msra.mxu0 0.0
    %1726 = vmatprep.subr.mxu0 0.0
    %1727 = vmatpush1.msra.mxu0 0.0
    %1728 = vmatprep.subr.mxu0 0.0
    %1729 = vmatpush1.msra.mxu0 0.0
    %1730 = vmatprep.subr.mxu0 0.0
    %1731 = vmatpush1.msra.mxu0 0.0
    %1732 = vmatprep.subr.mxu0 0.0
    %1733 = vmatpush1.msra.mxu0 0.0
    %1734 = vmatprep.subr.mxu0 0.0
    %1735 = vmatpush1.msra.mxu0 0.0
    %1736 = vmatprep.subr.mxu0 0.0
    %1737 = vmatpush1.msra.mxu0 0.0
    %1738 = vmatprep.subr.mxu0 0.0
    %1739 = vmatpush1.msra.mxu0 0.0
    %1740 = vmatprep.mubr.f32.mxu0 0.0
    %1741 = vmatmul.mubr.f32.gmra.mrb[0].mxu0 %v1674
    %v1742 = vpop.f32.mrb[0].mxu0
    %v1743 = vadd.f32 0.0, %v1742
    %v1744 = vpop.f32.mrb[0].mxu0
    %1745 = vdwg.mxu0
    %1746 = vrot.lane.b32.xlu0 %v317, 112
    %v1747 = vpop.permute.xlu0 %1746
    %v1748 = vsel %vm521, %v1747, 0
    %1750 = vmatprep.subr.mxu0 0.0
    %1751 = vmatpush1.msra.mxu0 %v1669
    %1752 = vmatprep.subr.mxu0 0.0
    %1753 = vmatpush1.msra.mxu0 0.0
    %1754 = vmatprep.subr.mxu0 0.0
    %1755 = vmatpush1.msra.mxu0 0.0
    %1756 = vmatprep.subr.mxu0 0.0
    %1757 = vmatpush1.msra.mxu0 0.0
    %1758 = vmatprep.subr.mxu0 0.0
    %1759 = vmatpush1.msra.mxu0 0.0
    %1760 = vmatprep.subr.mxu0 0.0
    %1761 = vmatpush1.msra.mxu0 0.0
    %1762 = vmatprep.subr.mxu0 0.0
    %1763 = vmatpush1.msra.mxu0 0.0
    %1764 = vmatprep.subr.mxu0 0.0
    %1765 = vmatpush1.msra.mxu0 0.0
    %1766 = vmatprep.subr.mxu0 0.0
    %1767 = vmatpush1.msra.mxu0 0.0
    %1768 = vmatprep.subr.mxu0 0.0
    %1769 = vmatpush1.msra.mxu0 0.0
    %1770 = vmatprep.subr.mxu0 0.0
    %1771 = vmatpush1.msra.mxu0 0.0
    %1772 = vmatprep.subr.mxu0 0.0
    %1773 = vmatpush1.msra.mxu0 0.0
    %1774 = vmatprep.subr.mxu0 0.0
    %1775 = vmatpush1.msra.mxu0 0.0
    %1776 = vmatprep.subr.mxu0 0.0
    %1777 = vmatpush1.msra.mxu0 0.0
    %1778 = vmatprep.subr.mxu0 0.0
    %1779 = vmatpush1.msra.mxu0 0.0
    %1780 = vmatprep.subr.mxu0 0.0
    %1781 = vmatpush1.msra.mxu0 0.0
    %1782 = vmatprep.subr.mxu0 0.0
    %1783 = vmatpush1.msra.mxu0 0.0
    %1784 = vmatprep.subr.mxu0 0.0
    %1785 = vmatpush1.msra.mxu0 0.0
    %1786 = vmatprep.subr.mxu0 0.0
    %1787 = vmatpush1.msra.mxu0 0.0
    %1788 = vmatprep.subr.mxu0 0.0
    %1789 = vmatpush1.msra.mxu0 0.0
    %1790 = vmatprep.subr.mxu0 0.0
    %1791 = vmatpush1.msra.mxu0 0.0
    %1792 = vmatprep.subr.mxu0 0.0
    %1793 = vmatpush1.msra.mxu0 0.0
    %1794 = vmatprep.subr.mxu0 0.0
    %1795 = vmatpush1.msra.mxu0 0.0
    %1796 = vmatprep.subr.mxu0 0.0
    %1797 = vmatpush1.msra.mxu0 0.0
    %1798 = vmatprep.subr.mxu0 0.0
    %1799 = vmatpush1.msra.mxu0 0.0
    %1800 = vmatprep.subr.mxu0 0.0
    %1801 = vmatpush1.msra.mxu0 0.0
    %1802 = vmatprep.subr.mxu0 0.0
    %1803 = vmatpush1.msra.mxu0 0.0
    %1804 = vmatprep.subr.mxu0 0.0
    %1805 = vmatpush1.msra.mxu0 0.0
    %1806 = vmatprep.subr.mxu0 0.0
    %1807 = vmatpush1.msra.mxu0 0.0
    %1808 = vmatprep.subr.mxu0 0.0
    %1809 = vmatpush1.msra.mxu0 0.0
    %1810 = vmatprep.subr.mxu0 0.0
    %1811 = vmatpush1.msra.mxu0 0.0
    %1812 = vmatprep.subr.mxu0 0.0
    %1813 = vmatpush1.msra.mxu0 0.0
    %1814 = vmatprep.mubr.f32.mxu0 0.0
    %1815 = vmatmul.mubr.f32.gmra.mrb[0].mxu0 %v1748
    %v1816 = vpop.f32.mrb[0].mxu0
    %v1817 = vadd.f32 0.0, %v1816
    %v1818 = vpop.f32.mrb[0].mxu0
    %1819 = vdwg.mxu0
    %vm1820 = vcmask 195712
    %v1821 = vsel %vm1820, %v478, 0.0
    %v1822 = vrot.slane %v1821, 4
    %v1823 = vadd.f32 %v1821, %v1822
    %v1824 = vrot.slane %v1823, 2
    %v1825 = vadd.f32 %v1823, %v1824
    %v1826 = vrot.slane %v1825, 1
    %v1827 = vadd.f32 %v1825, %v1826
    %v1828 = vsel %vm1820, %v483, 0.0
    %v1829 = vrot.slane %v1828, 4
    %v1830 = vadd.f32 %v1828, %v1829
    %v1831 = vrot.slane %v1830, 2
    %v1832 = vadd.f32 %v1830, %v1831
    %v1833 = vrot.slane %v1832, 1
    %v1834 = vadd.f32 %v1832, %v1833
    %v1835 = vmul.f32 %v312, %v1827
    %v1836 = vmul.f32 %v317, %v1834
    %1839 = vrot.lane.b32.xlu0 %v1835, 112
    %v1840 = vpop.permute.xlu0 %1839
    %1841 = vrot.lane.b32.xlu0 %v1836, 112
    %v1842 = vpop.permute.xlu0 %1841
    %v1845 = vsel %vm521, %v1840, 0.0
    %1846 = vadd.xlane.f32.xlu0 %v1845
    %v1847 = vpop.xlane.xlu0 %1846
    %v1848 = vsel %vm521, %v1842, 0.0
    %1849 = vadd.xlane.f32.xlu0 %v1848
    %v1850 = vpop.xlane.xlu0 %1849
    %v1851 = vadd.f32 %v1847, 1e-08
    %v1852 = vadd.f32 %v1850, 1e-08
    %v1853 = vrcp.pop %v1851
    %v1854 = vmul.f32 %v1743, %v1853
    %v1855 = vrcp.pop %v1852
    %v1856 = vmul.f32 %v1817, %v1855
    %v1857 = vld [vmem:[%s6 + $0x10] sm:$0xff]
    %v1859 = vsel %vm521, %v1854, 0
    %v1862 = vsel %vm521, %v1856, 0
    %1864 = vmatprep.subr.mxu0 0.0
    %1865 = vmatpush1.msra.mxu0 %v1857
    %1866 = vmatprep.subr.mxu0 0.0
    %1867 = vmatpush1.msra.mxu0 0.0
    %1868 = vmatprep.subr.mxu0 0.0
    %1869 = vmatpush1.msra.mxu0 0.0
    %1870 = vmatprep.subr.mxu0 0.0
    %1871 = vmatpush1.msra.mxu0 0.0
    %1872 = vmatprep.subr.mxu0 0.0
    %1873 = vmatpush1.msra.mxu0 0.0
    %1874 = vmatprep.subr.mxu0 0.0
    %1875 = vmatpush1.msra.mxu0 0.0
    %1876 = vmatprep.subr.mxu0 0.0
    %1877 = vmatpush1.msra.mxu0 0.0
    %1878 = vmatprep.subr.mxu0 0.0
    %1879 = vmatpush1.msra.mxu0 0.0
    %1880 = vmatprep.subr.mxu0 0.0
    %1881 = vmatpush1.msra.mxu0 0.0
    %1882 = vmatprep.subr.mxu0 0.0
    %1883 = vmatpush1.msra.mxu0 0.0
    %1884 = vmatprep.subr.mxu0 0.0
    %1885 = vmatpush1.msra.mxu0 0.0
    %1886 = vmatprep.subr.mxu0 0.0
    %1887 = vmatpush1.msra.mxu0 0.0
    %1888 = vmatprep.subr.mxu0 0.0
    %1889 = vmatpush1.msra.mxu0 0.0
    %1890 = vmatprep.subr.mxu0 0.0
    %1891 = vmatpush1.msra.mxu0 0.0
    %1892 = vmatprep.subr.mxu0 0.0
    %1893 = vmatpush1.msra.mxu0 0.0
    %1894 = vmatprep.subr.mxu0 0.0
    %1895 = vmatpush1.msra.mxu0 0.0
    %1896 = vmatprep.subr.mxu0 0.0
    %1897 = vmatpush1.msra.mxu0 0.0
    %1898 = vmatprep.subr.mxu0 0.0
    %1899 = vmatpush1.msra.mxu0 0.0
    %1900 = vmatprep.subr.mxu0 0.0
    %1901 = vmatpush1.msra.mxu0 0.0
    %1902 = vmatprep.subr.mxu0 0.0
    %1903 = vmatpush1.msra.mxu0 0.0
    %1904 = vmatprep.subr.mxu0 0.0
    %1905 = vmatpush1.msra.mxu0 0.0
    %1906 = vmatprep.subr.mxu0 0.0
    %1907 = vmatpush1.msra.mxu0 0.0
    %1908 = vmatprep.subr.mxu0 0.0
    %1909 = vmatpush1.msra.mxu0 0.0
    %1910 = vmatprep.subr.mxu0 0.0
    %1911 = vmatpush1.msra.mxu0 0.0
    %1912 = vmatprep.subr.mxu0 0.0
    %1913 = vmatpush1.msra.mxu0 0.0
    %1914 = vmatprep.subr.mxu0 0.0
    %1915 = vmatpush1.msra.mxu0 0.0
    %1916 = vmatprep.subr.mxu0 0.0
    %1917 = vmatpush1.msra.mxu0 0.0
    %1918 = vmatprep.subr.mxu0 0.0
    %1919 = vmatpush1.msra.mxu0 0.0
    %1920 = vmatprep.subr.mxu0 0.0
    %1921 = vmatpush1.msra.mxu0 0.0
    %1922 = vmatprep.subr.mxu0 0.0
    %1923 = vmatpush1.msra.mxu0 0.0
    %1924 = vmatprep.subr.mxu0 0.0
    %1925 = vmatpush1.msra.mxu0 0.0
    %1926 = vmatprep.subr.mxu0 0.0
    %1927 = vmatpush1.msra.mxu0 0.0
    %1928 = vmatprep.mubr.f32.mxu0 0.0
    %1929 = vmatmul.mubr.f32.gmra.mrb[0].mxu0 %v1859
    %v1930 = vpop.f32.mrb[0].mxu0
    %v1931 = vadd.f32 0.0, %v1930
    %v1932 = vpop.f32.mrb[0].mxu0
    %1933 = vmatprep.mubr.f32.mxu0 0.0
    %1934 = vmatmul.mubr.f32.gmra.mrb[0].mxu0 %v1862
    %v1935 = vpop.f32.mrb[0].mxu0
    %v1936 = vadd.f32 0.0, %v1935
    %v1937 = vpop.f32.mrb[0].mxu0
    %1938 = vdwg.mxu0
    %v1939 = vadd.f32 %v1442, %v1931
    %v1940 = vadd.f32 %v1447, %v1936
    %1941 = vrot.lane.b32.xlu0 %v478, 104
    %v1942 = vpop.permute.xlu0 %1941
    %1944 = vxpose.xlu0.b32.start [1/16] %v1942, 128
    %1945 = vxpose.xlu0.b32.cont [2/16] 0.0, 128
    %1946 = vxpose.xlu0.b32.cont [3/16] 0.0, 128
    %1947 = vxpose.xlu0.b32.cont [4/16] 0.0, 128
    %1948 = vxpose.xlu0.b32.cont [5/16] 0.0, 128
    %1949 = vxpose.xlu0.b32.cont [6/16] 0.0, 128
    %1950 = vxpose.xlu0.b32.cont [7/16] 0.0, 128
    %1951 = vxpose.xlu0.b32.cont [8/16] 0.0, 128
    %1952 = vxpose.xlu0.b32.cont [9/16] 0.0, 128
    %1953 = vxpose.xlu0.b32.cont [10/16] 0.0, 128
    %1954 = vxpose.xlu0.b32.cont [11/16] 0.0, 128
    %1955 = vxpose.xlu0.b32.cont [12/16] 0.0, 128
    %1956 = vxpose.xlu0.b32.cont [13/16] 0.0, 128
    %1957 = vxpose.xlu0.b32.cont [14/16] 0.0, 128
    %1958 = vxpose.xlu0.b32.cont [15/16] 0.0, 128
    %1959 = vxpose.xlu0.b32.end [16/16] 0.0, 128
    %v1960 = vpop.trf.xlu0
    %v1961 = vpop.trf.xlu0
    %v1962 = vpop.trf.xlu0
    %v1963 = vpop.trf.xlu0
    %v1964 = vpop.trf.xlu0
    %v1965 = vpop.trf.xlu0
    %v1966 = vpop.trf.xlu0
    %v1967 = vpop.trf.xlu0
    %v1968 = vpop.trf.xlu0
    %v1969 = vpop.trf.xlu0
    %v1970 = vpop.trf.xlu0
    %v1971 = vpop.trf.xlu0
    %v1972 = vpop.trf.xlu0
    %v1973 = vpop.trf.xlu0
    %v1974 = vpop.trf.xlu0
    %v1975 = vpop.trf.xlu0
    %1976 = vrot.lane.b32.xlu0 %v121, 40
    %v1977 = vpop.permute.xlu0 %1976
    %v1980 = vsel %vm521, %v1960, 0
    %1982 = vmatprep.subr.mxu0 0.0
    %1983 = vmatpush1.msra.mxu0 %v1977
    %1984 = vmatprep.subr.mxu0 0.0
    %1985 = vmatpush1.msra.mxu0 0.0
    %1986 = vmatprep.subr.mxu0 0.0
    %1987 = vmatpush1.msra.mxu0 0.0
    %1988 = vmatprep.subr.mxu0 0.0
    %1989 = vmatpush1.msra.mxu0 0.0
    %1990 = vmatprep.subr.mxu0 0.0
    %1991 = vmatpush1.msra.mxu0 0.0
    %1992 = vmatprep.subr.mxu0 0.0
    %1993 = vmatpush1.msra.mxu0 0.0
    %1994 = vmatprep.subr.mxu0 0.0
    %1995 = vmatpush1.msra.mxu0 0.0
    %1996 = vmatprep.subr.mxu0 0.0
    %1997 = vmatpush1.msra.mxu0 0.0
    %1998 = vmatprep.subr.mxu0 0.0
    %1999 = vmatpush1.msra.mxu0 0.0
    %2000 = vmatprep.subr.mxu0 0.0
    %2001 = vmatpush1.msra.mxu0 0.0
    %2002 = vmatprep.subr.mxu0 0.0
    %2003 = vmatpush1.msra.mxu0 0.0
    %2004 = vmatprep.subr.mxu0 0.0
    %2005 = vmatpush1.msra.mxu0 0.0
    %2006 = vmatprep.subr.mxu0 0.0
    %2007 = vmatpush1.msra.mxu0 0.0
    %2008 = vmatprep.subr.mxu0 0.0
    %2009 = vmatpush1.msra.mxu0 0.0
    %2010 = vmatprep.subr.mxu0 0.0
    %2011 = vmatpush1.msra.mxu0 0.0
    %2012 = vmatprep.subr.mxu0 0.0
    %2013 = vmatpush1.msra.mxu0 0.0
    %2014 = vmatprep.subr.mxu0 0.0
    %2015 = vmatpush1.msra.mxu0 0.0
    %2016 = vmatprep.subr.mxu0 0.0
    %2017 = vmatpush1.msra.mxu0 0.0
    %2018 = vmatprep.subr.mxu0 0.0
    %2019 = vmatpush1.msra.mxu0 0.0
    %2020 = vmatprep.subr.mxu0 0.0
    %2021 = vmatpush1.msra.mxu0 0.0
    %2022 = vmatprep.subr.mxu0 0.0
    %2023 = vmatpush1.msra.mxu0 0.0
    %2024 = vmatprep.subr.mxu0 0.0
    %2025 = vmatpush1.msra.mxu0 0.0
    %2026 = vmatprep.subr.mxu0 0.0
    %2027 = vmatpush1.msra.mxu0 0.0
    %2028 = vmatprep.subr.mxu0 0.0
    %2029 = vmatpush1.msra.mxu0 0.0
    %2030 = vmatprep.subr.mxu0 0.0
    %2031 = vmatpush1.msra.mxu0 0.0
    %2032 = vmatprep.subr.mxu0 0.0
    %2033 = vmatpush1.msra.mxu0 0.0
    %2034 = vmatprep.subr.mxu0 0.0
    %2035 = vmatpush1.msra.mxu0 0.0
    %2036 = vmatprep.subr.mxu0 0.0
    %2037 = vmatpush1.msra.mxu0 0.0
    %2038 = vmatprep.subr.mxu0 0.0
    %2039 = vmatpush1.msra.mxu0 0.0
    %2040 = vmatprep.subr.mxu0 0.0
    %2041 = vmatpush1.msra.mxu0 0.0
    %2042 = vmatprep.subr.mxu0 0.0
    %2043 = vmatpush1.msra.mxu0 0.0
    %2044 = vmatprep.subr.mxu0 0.0
    %2045 = vmatpush1.msra.mxu0 0.0
    %2046 = vmatprep.mubr.f32.mxu0 0.0
    %2047 = vmatmul.mubr.f32.gmra.mrb[0].mxu0 %v1980
    %v2048 = vpop.f32.mrb[0].mxu0
    %v2049 = vadd.f32 0.0, %v2048
    %v2050 = vpop.f32.mrb[0].mxu0
    %2051 = vdwg.mxu0
    %2052 = vrot.lane.b32.xlu0 %v483, 104
    %v2053 = vpop.permute.xlu0 %2052
    %2055 = vxpose.xlu0.b32.start [1/16] %v2053, 128
    %2056 = vxpose.xlu0.b32.cont [2/16] 0.0, 128
    %2057 = vxpose.xlu0.b32.cont [3/16] 0.0, 128
    %2058 = vxpose.xlu0.b32.cont [4/16] 0.0, 128
    %2059 = vxpose.xlu0.b32.cont [5/16] 0.0, 128
    %2060 = vxpose.xlu0.b32.cont [6/16] 0.0, 128
    %2061 = vxpose.xlu0.b32.cont [7/16] 0.0, 128
    %2062 = vxpose.xlu0.b32.cont [8/16] 0.0, 128
    %2063 = vxpose.xlu0.b32.cont [9/16] 0.0, 128
    %2064 = vxpose.xlu0.b32.cont [10/16] 0.0, 128
    %2065 = vxpose.xlu0.b32.cont [11/16] 0.0, 128
    %2066 = vxpose.xlu0.b32.cont [12/16] 0.0, 128
    %2067 = vxpose.xlu0.b32.cont [13/16] 0.0, 128
    %2068 = vxpose.xlu0.b32.cont [14/16] 0.0, 128
    %2069 = vxpose.xlu0.b32.cont [15/16] 0.0, 128
    %2070 = vxpose.xlu0.b32.end [16/16] 0.0, 128
    %v2071 = vpop.trf.xlu0
    %v2072 = vpop.trf.xlu0
    %v2073 = vpop.trf.xlu0
    %v2074 = vpop.trf.xlu0
    %v2075 = vpop.trf.xlu0
    %v2076 = vpop.trf.xlu0
    %v2077 = vpop.trf.xlu0
    %v2078 = vpop.trf.xlu0
    %v2079 = vpop.trf.xlu0
    %v2080 = vpop.trf.xlu0
    %v2081 = vpop.trf.xlu0
    %v2082 = vpop.trf.xlu0
    %v2083 = vpop.trf.xlu0
    %v2084 = vpop.trf.xlu0
    %v2085 = vpop.trf.xlu0
    %v2086 = vpop.trf.xlu0
    %2087 = vrot.lane.b32.xlu0 %v126, 40
    %v2088 = vpop.permute.xlu0 %2087
    %v2091 = vsel %vm521, %v2071, 0
    %2093 = vmatprep.subr.mxu0 0.0
    %2094 = vmatpush1.msra.mxu0 %v2088
    %2095 = vmatprep.subr.mxu0 0.0
    %2096 = vmatpush1.msra.mxu0 0.0
    %2097 = vmatprep.subr.mxu0 0.0
    %2098 = vmatpush1.msra.mxu0 0.0
    %2099 = vmatprep.subr.mxu0 0.0
    %2100 = vmatpush1.msra.mxu0 0.0
    %2101 = vmatprep.subr.mxu0 0.0
    %2102 = vmatpush1.msra.mxu0 0.0
    %2103 = vmatprep.subr.mxu0 0.0
    %2104 = vmatpush1.msra.mxu0 0.0
    %2105 = vmatprep.subr.mxu0 0.0
    %2106 = vmatpush1.msra.mxu0 0.0
    %2107 = vmatprep.subr.mxu0 0.0
    %2108 = vmatpush1.msra.mxu0 0.0
    %2109 = vmatprep.subr.mxu0 0.0
    %2110 = vmatpush1.msra.mxu0 0.0
    %2111 = vmatprep.subr.mxu0 0.0
    %2112 = vmatpush1.msra.mxu0 0.0
    %2113 = vmatprep.subr.mxu0 0.0
    %2114 = vmatpush1.msra.mxu0 0.0
    %2115 = vmatprep.subr.mxu0 0.0
    %2116 = vmatpush1.msra.mxu0 0.0
    %2117 = vmatprep.subr.mxu0 0.0
    %2118 = vmatpush1.msra.mxu0 0.0
    %2119 = vmatprep.subr.mxu0 0.0
    %2120 = vmatpush1.msra.mxu0 0.0
    %2121 = vmatprep.subr.mxu0 0.0
    %2122 = vmatpush1.msra.mxu0 0.0
    %2123 = vmatprep.subr.mxu0 0.0
    %2124 = vmatpush1.msra.mxu0 0.0
    %2125 = vmatprep.subr.mxu0 0.0
    %2126 = vmatpush1.msra.mxu0 0.0
    %2127 = vmatprep.subr.mxu0 0.0
    %2128 = vmatpush1.msra.mxu0 0.0
    %2129 = vmatprep.subr.mxu0 0.0
    %2130 = vmatpush1.msra.mxu0 0.0
    %2131 = vmatprep.subr.mxu0 0.0
    %2132 = vmatpush1.msra.mxu0 0.0
    %2133 = vmatprep.subr.mxu0 0.0
    %2134 = vmatpush1.msra.mxu0 0.0
    %2135 = vmatprep.subr.mxu0 0.0
    %2136 = vmatpush1.msra.mxu0 0.0
    %2137 = vmatprep.subr.mxu0 0.0
    %2138 = vmatpush1.msra.mxu0 0.0
    %2139 = vmatprep.subr.mxu0 0.0
    %2140 = vmatpush1.msra.mxu0 0.0
    %2141 = vmatprep.subr.mxu0 0.0
    %2142 = vmatpush1.msra.mxu0 0.0
    %2143 = vmatprep.subr.mxu0 0.0
    %2144 = vmatpush1.msra.mxu0 0.0
    %2145 = vmatprep.subr.mxu0 0.0
    %2146 = vmatpush1.msra.mxu0 0.0
    %2147 = vmatprep.subr.mxu0 0.0
    %2148 = vmatpush1.msra.mxu0 0.0
    %2149 = vmatprep.subr.mxu0 0.0
    %2150 = vmatpush1.msra.mxu0 0.0
    %2151 = vmatprep.subr.mxu0 0.0
    %2152 = vmatpush1.msra.mxu0 0.0
    %2153 = vmatprep.subr.mxu0 0.0
    %2154 = vmatpush1.msra.mxu0 0.0
    %2155 = vmatprep.subr.mxu0 0.0
    %2156 = vmatpush1.msra.mxu0 0.0
    %2157 = vmatprep.mubr.f32.mxu0 0.0
    %2158 = vmatmul.mubr.f32.gmra.mrb[0].mxu0 %v2091
    %v2159 = vpop.f32.mrb[0].mxu0
    %v2160 = vadd.f32 0.0, %v2159
    %v2161 = vpop.f32.mrb[0].mxu0
    %2162 = vdwg.mxu0
    %2163 = vrot.lane.b32.xlu0 %v312, 104
    %v2164 = vpop.permute.xlu0 %2163
    %v2165 = vsel %vm521, %v2164, 0
    %2167 = vmatprep.subr.mxu0 0.0
    %2168 = vmatpush1.msra.mxu0 %v2049
    %2169 = vmatprep.subr.mxu0 0.0
    %2170 = vmatpush1.msra.mxu0 0.0
    %2171 = vmatprep.subr.mxu0 0.0
    %2172 = vmatpush1.msra.mxu0 0.0
    %2173 = vmatprep.subr.mxu0 0.0
    %2174 = vmatpush1.msra.mxu0 0.0
    %2175 = vmatprep.subr.mxu0 0.0
    %2176 = vmatpush1.msra.mxu0 0.0
    %2177 = vmatprep.subr.mxu0 0.0
    %2178 = vmatpush1.msra.mxu0 0.0
    %2179 = vmatprep.subr.mxu0 0.0
    %2180 = vmatpush1.msra.mxu0 0.0
    %2181 = vmatprep.subr.mxu0 0.0
    %2182 = vmatpush1.msra.mxu0 0.0
    %2183 = vmatprep.subr.mxu0 0.0
    %2184 = vmatpush1.msra.mxu0 0.0
    %2185 = vmatprep.subr.mxu0 0.0
    %2186 = vmatpush1.msra.mxu0 0.0
    %2187 = vmatprep.subr.mxu0 0.0
    %2188 = vmatpush1.msra.mxu0 0.0
    %2189 = vmatprep.subr.mxu0 0.0
    %2190 = vmatpush1.msra.mxu0 0.0
    %2191 = vmatprep.subr.mxu0 0.0
    %2192 = vmatpush1.msra.mxu0 0.0
    %2193 = vmatprep.subr.mxu0 0.0
    %2194 = vmatpush1.msra.mxu0 0.0
    %2195 = vmatprep.subr.mxu0 0.0
    %2196 = vmatpush1.msra.mxu0 0.0
    %2197 = vmatprep.subr.mxu0 0.0
    %2198 = vmatpush1.msra.mxu0 0.0
    %2199 = vmatprep.subr.mxu0 0.0
    %2200 = vmatpush1.msra.mxu0 0.0
    %2201 = vmatprep.subr.mxu0 0.0
    %2202 = vmatpush1.msra.mxu0 0.0
    %2203 = vmatprep.subr.mxu0 0.0
    %2204 = vmatpush1.msra.mxu0 0.0
    %2205 = vmatprep.subr.mxu0 0.0
    %2206 = vmatpush1.msra.mxu0 0.0
    %2207 = vmatprep.subr.mxu0 0.0
    %2208 = vmatpush1.msra.mxu0 0.0
    %2209 = vmatprep.subr.mxu0 0.0
    %2210 = vmatpush1.msra.mxu0 0.0
    %2211 = vmatprep.subr.mxu0 0.0
    %2212 = vmatpush1.msra.mxu0 0.0
    %2213 = vmatprep.subr.mxu0 0.0
    %2214 = vmatpush1.msra.mxu0 0.0
    %2215 = vmatprep.subr.mxu0 0.0
    %2216 = vmatpush1.msra.mxu0 0.0
    %2217 = vmatprep.subr.mxu0 0.0
    %2218 = vmatpush1.msra.mxu0 0.0
    %2219 = vmatprep.subr.mxu0 0.0
    %2220 = vmatpush1.msra.mxu0 0.0
    %2221 = vmatprep.subr.mxu0 0.0
    %2222 = vmatpush1.msra.mxu0 0.0
    %2223 = vmatprep.subr.mxu0 0.0
    %2224 = vmatpush1.msra.mxu0 0.0
    %2225 = vmatprep.subr.mxu0 0.0
    %2226 = vmatpush1.msra.mxu0 0.0
    %2227 = vmatprep.subr.mxu0 0.0
    %2228 = vmatpush1.msra.mxu0 0.0
    %2229 = vmatprep.subr.mxu0 0.0
    %2230 = vmatpush1.msra.mxu0 0.0
    %2231 = vmatprep.mubr.f32.mxu0 0.0
    %2232 = vmatmul.mubr.f32.gmra.mrb[0].mxu0 %v2165
    %v2233 = vpop.f32.mrb[0].mxu0
    %v2234 = vadd.f32 0.0, %v2233
    %v2235 = vpop.f32.mrb[0].mxu0
    %2236 = vdwg.mxu0
    %2237 = vrot.lane.b32.xlu0 %v317, 104
    %v2238 = vpop.permute.xlu0 %2237
    %v2239 = vsel %vm521, %v2238, 0
    %2241 = vmatprep.subr.mxu0 0.0
    %2242 = vmatpush1.msra.mxu0 %v2160
    %2243 = vmatprep.subr.mxu0 0.0
    %2244 = vmatpush1.msra.mxu0 0.0
    %2245 = vmatprep.subr.mxu0 0.0
    %2246 = vmatpush1.msra.mxu0 0.0
    %2247 = vmatprep.subr.mxu0 0.0
    %2248 = vmatpush1.msra.mxu0 0.0
    %2249 = vmatprep.subr.mxu0 0.0
    %2250 = vmatpush1.msra.mxu0 0.0
    %2251 = vmatprep.subr.mxu0 0.0
    %2252 = vmatpush1.msra.mxu0 0.0
    %2253 = vmatprep.subr.mxu0 0.0
    %2254 = vmatpush1.msra.mxu0 0.0
    %2255 = vmatprep.subr.mxu0 0.0
    %2256 = vmatpush1.msra.mxu0 0.0
    %2257 = vmatprep.subr.mxu0 0.0
    %2258 = vmatpush1.msra.mxu0 0.0
    %2259 = vmatprep.subr.mxu0 0.0
    %2260 = vmatpush1.msra.mxu0 0.0
    %2261 = vmatprep.subr.mxu0 0.0
    %2262 = vmatpush1.msra.mxu0 0.0
    %2263 = vmatprep.subr.mxu0 0.0
    %2264 = vmatpush1.msra.mxu0 0.0
    %2265 = vmatprep.subr.mxu0 0.0
    %2266 = vmatpush1.msra.mxu0 0.0
    %2267 = vmatprep.subr.mxu0 0.0
    %2268 = vmatpush1.msra.mxu0 0.0
    %2269 = vmatprep.subr.mxu0 0.0
    %2270 = vmatpush1.msra.mxu0 0.0
    %2271 = vmatprep.subr.mxu0 0.0
    %2272 = vmatpush1.msra.mxu0 0.0
    %2273 = vmatprep.subr.mxu0 0.0
    %2274 = vmatpush1.msra.mxu0 0.0
    %2275 = vmatprep.subr.mxu0 0.0
    %2276 = vmatpush1.msra.mxu0 0.0
    %2277 = vmatprep.subr.mxu0 0.0
    %2278 = vmatpush1.msra.mxu0 0.0
    %2279 = vmatprep.subr.mxu0 0.0
    %2280 = vmatpush1.msra.mxu0 0.0
    %2281 = vmatprep.subr.mxu0 0.0
    %2282 = vmatpush1.msra.mxu0 0.0
    %2283 = vmatprep.subr.mxu0 0.0
    %2284 = vmatpush1.msra.mxu0 0.0
    %2285 = vmatprep.subr.mxu0 0.0
    %2286 = vmatpush1.msra.mxu0 0.0
    %2287 = vmatprep.subr.mxu0 0.0
    %2288 = vmatpush1.msra.mxu0 0.0
    %2289 = vmatprep.subr.mxu0 0.0
    %2290 = vmatpush1.msra.mxu0 0.0
    %2291 = vmatprep.subr.mxu0 0.0
    %2292 = vmatpush1.msra.mxu0 0.0
    %2293 = vmatprep.subr.mxu0 0.0
    %2294 = vmatpush1.msra.mxu0 0.0
    %2295 = vmatprep.subr.mxu0 0.0
    %2296 = vmatpush1.msra.mxu0 0.0
    %2297 = vmatprep.subr.mxu0 0.0
    %2298 = vmatpush1.msra.mxu0 0.0
    %2299 = vmatprep.subr.mxu0 0.0
    %2300 = vmatpush1.msra.mxu0 0.0
    %2301 = vmatprep.subr.mxu0 0.0
    %2302 = vmatpush1.msra.mxu0 0.0
    %2303 = vmatprep.subr.mxu0 0.0
    %2304 = vmatpush1.msra.mxu0 0.0
    %2305 = vmatprep.mubr.f32.mxu0 0.0
    %2306 = vmatmul.mubr.f32.gmra.mrb[0].mxu0 %v2239
    %v2307 = vpop.f32.mrb[0].mxu0
    %v2308 = vadd.f32 0.0, %v2307
    %v2309 = vpop.f32.mrb[0].mxu0
    %2310 = vdwg.mxu0
    %vm2311 = vcmask 261312
    %v2312 = vsel %vm2311, %v478, 0.0
    %v2313 = vrot.slane %v2312, 4
    %v2314 = vadd.f32 %v2312, %v2313
    %v2315 = vrot.slane %v2314, 2
    %v2316 = vadd.f32 %v2314, %v2315
    %v2317 = vrot.slane %v2316, 1
    %v2318 = vadd.f32 %v2316, %v2317
    %v2319 = vsel %vm2311, %v483, 0.0
    %v2320 = vrot.slane %v2319, 4
    %v2321 = vadd.f32 %v2319, %v2320
    %v2322 = vrot.slane %v2321, 2
    %v2323 = vadd.f32 %v2321, %v2322
    %v2324 = vrot.slane %v2323, 1
    %v2325 = vadd.f32 %v2323, %v2324
    %v2326 = vmul.f32 %v312, %v2318
    %v2327 = vmul.f32 %v317, %v2325
    %2330 = vrot.lane.b32.xlu0 %v2326, 104
    %v2331 = vpop.permute.xlu0 %2330
    %2332 = vrot.lane.b32.xlu0 %v2327, 104
    %v2333 = vpop.permute.xlu0 %2332
    %v2336 = vsel %vm521, %v2331, 0.0
    %2337 = vadd.xlane.f32.xlu0 %v2336
    %v2338 = vpop.xlane.xlu0 %2337
    %v2339 = vsel %vm521, %v2333, 0.0
    %2340 = vadd.xlane.f32.xlu0 %v2339
    %v2341 = vpop.xlane.xlu0 %2340
    %v2342 = vadd.f32 %v2338, 1e-08
    %v2343 = vadd.f32 %v2341, 1e-08
    %v2344 = vrcp.pop %v2342
    %v2345 = vmul.f32 %v2234, %v2344
    %v2346 = vrcp.pop %v2343
    %v2347 = vmul.f32 %v2308, %v2346
    %v2348 = vld [vmem:[%s6 + $0x18] sm:$0xff]
    %v2350 = vsel %vm521, %v2345, 0
    %v2353 = vsel %vm521, %v2347, 0
    %2355 = vmatprep.subr.mxu0 0.0
    %2356 = vmatpush1.msra.mxu0 %v2348
    %2357 = vmatprep.subr.mxu0 0.0
    %2358 = vmatpush1.msra.mxu0 0.0
    %2359 = vmatprep.subr.mxu0 0.0
    %2360 = vmatpush1.msra.mxu0 0.0
    %2361 = vmatprep.subr.mxu0 0.0
    %2362 = vmatpush1.msra.mxu0 0.0
    %2363 = vmatprep.subr.mxu0 0.0
    %2364 = vmatpush1.msra.mxu0 0.0
    %2365 = vmatprep.subr.mxu0 0.0
    %2366 = vmatpush1.msra.mxu0 0.0
    %2367 = vmatprep.subr.mxu0 0.0
    %2368 = vmatpush1.msra.mxu0 0.0
    %2369 = vmatprep.subr.mxu0 0.0
    %2370 = vmatpush1.msra.mxu0 0.0
    %2371 = vmatprep.subr.mxu0 0.0
    %2372 = vmatpush1.msra.mxu0 0.0
    %2373 = vmatprep.subr.mxu0 0.0
    %2374 = vmatpush1.msra.mxu0 0.0
    %2375 = vmatprep.subr.mxu0 0.0
    %2376 = vmatpush1.msra.mxu0 0.0
    %2377 = vmatprep.subr.mxu0 0.0
    %2378 = vmatpush1.msra.mxu0 0.0
    %2379 = vmatprep.subr.mxu0 0.0
    %2380 = vmatpush1.msra.mxu0 0.0
    %2381 = vmatprep.subr.mxu0 0.0
    %2382 = vmatpush1.msra.mxu0 0.0
    %2383 = vmatprep.subr.mxu0 0.0
    %2384 = vmatpush1.msra.mxu0 0.0
    %2385 = vmatprep.subr.mxu0 0.0
    %2386 = vmatpush1.msra.mxu0 0.0
    %2387 = vmatprep.subr.mxu0 0.0
    %2388 = vmatpush1.msra.mxu0 0.0
    %2389 = vmatprep.subr.mxu0 0.0
    %2390 = vmatpush1.msra.mxu0 0.0
    %2391 = vmatprep.subr.mxu0 0.0
    %2392 = vmatpush1.msra.mxu0 0.0
    %2393 = vmatprep.subr.mxu0 0.0
    %2394 = vmatpush1.msra.mxu0 0.0
    %2395 = vmatprep.subr.mxu0 0.0
    %2396 = vmatpush1.msra.mxu0 0.0
    %2397 = vmatprep.subr.mxu0 0.0
    %2398 = vmatpush1.msra.mxu0 0.0
    %2399 = vmatprep.subr.mxu0 0.0
    %2400 = vmatpush1.msra.mxu0 0.0
    %2401 = vmatprep.subr.mxu0 0.0
    %2402 = vmatpush1.msra.mxu0 0.0
    %2403 = vmatprep.subr.mxu0 0.0
    %2404 = vmatpush1.msra.mxu0 0.0
    %2405 = vmatprep.subr.mxu0 0.0
    %2406 = vmatpush1.msra.mxu0 0.0
    %2407 = vmatprep.subr.mxu0 0.0
    %2408 = vmatpush1.msra.mxu0 0.0
    %2409 = vmatprep.subr.mxu0 0.0
    %2410 = vmatpush1.msra.mxu0 0.0
    %2411 = vmatprep.subr.mxu0 0.0
    %2412 = vmatpush1.msra.mxu0 0.0
    %2413 = vmatprep.subr.mxu0 0.0
    %2414 = vmatpush1.msra.mxu0 0.0
    %2415 = vmatprep.subr.mxu0 0.0
    %2416 = vmatpush1.msra.mxu0 0.0
    %2417 = vmatprep.subr.mxu0 0.0
    %2418 = vmatpush1.msra.mxu0 0.0
    %2419 = vmatprep.mubr.f32.mxu0 0.0
    %2420 = vmatmul.mubr.f32.gmra.mrb[0].mxu0 %v2350
    %v2421 = vpop.f32.mrb[0].mxu0
    %v2422 = vadd.f32 0.0, %v2421
    %v2423 = vpop.f32.mrb[0].mxu0
    %2424 = vmatprep.mubr.f32.mxu0 0.0
    %2425 = vmatmul.mubr.f32.gmra.mrb[0].mxu0 %v2353
    %v2426 = vpop.f32.mrb[0].mxu0
    %v2427 = vadd.f32 0.0, %v2426
    %v2428 = vpop.f32.mrb[0].mxu0
    %2429 = vdwg.mxu0
    %v2430 = vadd.f32 %v1939, %v2422
    %v2431 = vadd.f32 %v1940, %v2427
    %2432 = vst.msk [vmem:[#allocation5] sm:$0xff] %vm47, %v2430
    %2433 = vst.msk [vmem:[#allocation5 + $0x8] sm:$0xff] %vm47, %v2431
    // Predicated region
    $region34: #{tpu_custom_call.1} parent=1 // pred_check
      _
    $region35: #{tpu_custom_call.1} parent=1 // pred_check_branch
      %2435 = sbr.rel (0) target = $region37
    $region36: #{tpu_custom_call.1} parent=1 // pred_region
      %s2437 = ssub.s32 256, 256
      %2438 = vsyncadd [#allocation4], %s2437
      %s2439 = sshll.u32 [#allocation5], 4
      %s2440 = int_to_ptr.vmem [resolvable:$true] %s2439
      %2445 = dma.vmem_to_hbm [thread:$0]  %s2440, 256, %s7, [#allocation4], 128, 128, 8
    $region37: #{tpu_custom_call.1} parent=1 // pred_fallthru
      _
    // Predicated region
    $region38: #{tpu_custom_call.1} parent=1 // pred_check
      _
    $region39: #{tpu_custom_call.1} parent=1 // pred_check_branch
      %2447 = sbr.rel (0) target = $region41
    $region40: #{tpu_custom_call.1} parent=1 // pred_region
      %2448 = dma.done [#allocation4], 256
    $region41: #{tpu_custom_call.1} parent=1 // pred_fallthru
      _
    %2449 = vsyncpa [#allocation3], 1
    %2450 = vsyncpa [#allocation4], 1

</llo_original>
